<compile_context>
chip_gen: v7x
topology: tpu7x:2x2x1
jax: 0.10.0
libtpu: 0.0.40
codegen_flags: <defaults>
</compile_context>

<pallas_src>
import math
import functools

import jax
import jax.numpy as jnp
from jax import lax
from jax.experimental import pallas as pl
from jax.experimental.pallas import tpu as pltpu


# --------------------------- small helpers ---------------------------------- #

def _log_sigmoid(x):
    # Numerically stable log-sigmoid using only exp/log (safe on all TPU gens):
    # log_sigmoid(x) = min(x, 0) - log(1 + exp(-|x|)),  exp(-|x|) in (0, 1].
    return jnp.minimum(x, 0.0) - jnp.log(1.0 + jnp.exp(-jnp.abs(x)))


def _pad_rows(x, tile):
    pad = (-x.shape[0]) % tile
    return x if pad == 0 else jnp.pad(x, ((0, pad), (0, 0)))


def _compiler_params(vmem_hint_bytes):
    kwargs = dict(dimension_semantics=("arbitrary",))   # grid axis carries accumulator
    # v5e scoped-VMEM default is 16 MiB; only raise the limit when the
    # double-buffered working set actually needs it (cap below v7x 64 MiB phys).
    if vmem_hint_bytes > (12 << 20):
        kwargs["vmem_limit_bytes"] = min(int(vmem_hint_bytes * 1.5), 56 << 20)
    return pltpu.CompilerParams(**kwargs)


# ------------------- fused forward kernel (enc + enc + summary) ------------- #

def _fwd_kernel(xp_ref, xn_ref, w_ref, b_ref,      # inputs
                zp_ref, zn_ref, s_ref,             # outputs
                acc_ref,                           # VMEM scratch (1, H) f32
                *, n_real, tile_n):
    i = pl.program_id(0)
    last = pl.num_programs(0) - 1
    rem = n_real % tile_n                           # static python int

    @pl.when(i == 0)
    def _():
        acc_ref[...] = jnp.zeros_like(acc_ref)

    # Fused pos/neg encoder: one (2*tile_n, F) @ (F, H) MXU call.
    # x is f32 in HBM; cast to bf16 in-kernel (no wrapper-side cast pass).
    xcat = jnp.concatenate([xp_ref[...].astype(jnp.bfloat16),
                            xn_ref[...].astype(jnp.bfloat16)], axis=0)
    z = jnp.dot(xcat, w_ref[...], preferred_element_type=jnp.float32)
    z = jnp.maximum(z + b_ref[...], 0.0)            # bias + ReLU in f32
    zp = z[:tile_n]
    zn = z[tile_n:]
    zp_ref[...] = zp.astype(zp_ref.dtype)           # bf16 store (half the writes)
    zn_ref[...] = zn.astype(zn_ref.dtype)

    # DGI summary accumulator — positive embeddings only.  Padded rows exist
    # only in the last tile, so mask only there.
    if rem == 0:
        acc_ref[...] += jnp.sum(zp, axis=0, keepdims=True)
    else:
        @pl.when(i != last)
        def _():
            acc_ref[...] += jnp.sum(zp, axis=0, keepdims=True)

        @pl.when(i == last)
        def _():
            row = lax.broadcasted_iota(jnp.int32, (tile_n, 1), 0)
            acc_ref[...] += jnp.sum(jnp.where(row < rem, zp, 0.0),
                                    axis=0, keepdims=True)

    @pl.when(i == last)
    def _():
        s_ref[...] = jax.nn.sigmoid(acc_ref[...] / float(n_real)).astype(s_ref.dtype)


def _fused_forward(xp, xn, w, b, n_real, tile_n):
    """xp/xn: (N_pad, F) f32, w: (F, H) bf16, b: (1, H) f32
       -> zp (N_pad, H) bf16, zn (N_pad, H) bf16, summary (1, H) f32."""
    n_pad, f = xp.shape
    h = w.shape[1]
    grid = (n_pad // tile_n,)
    kernel = functools.partial(_fwd_kernel, n_real=n_real, tile_n=tile_n)
    # double-buffered working set estimate (inputs f32, outputs bf16) + weights
    vmem_hint = 2 * tile_n * (2 * f * 4 + 2 * h * 2) + f * h * 2 + 16 * h * 4
    return pl.pallas_call(
        kernel,
        out_shape=(jax.ShapeDtypeStruct((n_pad, h), jnp.bfloat16),
                   jax.ShapeDtypeStruct((n_pad, h), jnp.bfloat16),
                   jax.ShapeDtypeStruct((1, h), jnp.float32)),
        grid_spec=pltpu.PrefetchScalarGridSpec(
            num_scalar_prefetch=0,
            grid=grid,
            in_specs=[
                pl.BlockSpec((tile_n, f), lambda i: (i, 0)),
                pl.BlockSpec((tile_n, f), lambda i: (i, 0)),
                pl.BlockSpec((f, h), lambda i: (0, 0)),
                pl.BlockSpec((1, h), lambda i: (0, 0)),
            ],
            out_specs=[
                pl.BlockSpec((tile_n, h), lambda i: (i, 0)),
                pl.BlockSpec((tile_n, h), lambda i: (i, 0)),
                pl.BlockSpec((1, h), lambda i: (0, 0)),
            ],
            scratch_shapes=[pltpu.VMEM((1, h), jnp.float32)],
        ),
        compiler_params=_compiler_params(vmem_hint),
    )(xp, xn, w, b)


# ------------- fused discriminator + BCE loss kernel (per node type) -------- #

def _loss_kernel(zp_ref, zn_ref, s_ref, w_ref,     # inputs
                 out_ref,                          # output (1, 1) f32
                 st_ref, acc_ref,                  # VMEM scratch
                 *, n_real, tile_n):
    i = pl.program_id(0)
    last = pl.num_programs(0) - 1
    rem = n_real % tile_n                           # static python int

    @pl.when(i == 0)
    def _():
        # Hoisted: st = summary @ W_disc computed once, kept resident in VMEM (bf16).
        st = jnp.dot(s_ref[...].astype(jnp.bfloat16), w_ref[...],
                     preferred_element_type=jnp.float32)
        st_ref[...] = st.astype(st_ref.dtype)
        acc_ref[...] = jnp.zeros_like(acc_ref)

    st = st_ref[...]                                             # (1, H) bf16
    zcat = jnp.concatenate([zp_ref[...], zn_ref[...]], axis=0)   # (2*tile_n, H) bf16
    dn = (((1,), (1,)), ((), ()))                                # contract H with H
    # Lane-dense (1, 2*tile_n) scores on the MXU (A @ B^T form), one call.
    scores = lax.dot_general(st, zcat, dn, preferred_element_type=jnp.float32)
    pos = scores[:, :tile_n]
    neg = scores[:, tile_n:]
    vals = _log_sigmoid(pos) + _log_sigmoid(-neg)                # (1, tile_n) f32

    if rem == 0:
        acc_ref[...] += jnp.sum(vals, keepdims=True)
    else:
        @pl.when(i != last)
        def _():
            acc_ref[...] += jnp.sum(vals, keepdims=True)

        @pl.when(i == last)
        def _():
            col = lax.broadcasted_iota(jnp.int32, (1, tile_n), 1)
            acc_ref[...] += jnp.sum(jnp.where(col < rem, vals, 0.0), keepdims=True)

    @pl.when(i == last)
    def _():
        # node_loss = -(logsigmoid(pos) + logsigmoid(-neg)).mean()
        out_ref[...] = -(acc_ref[...] / float(n_real))


def _fused_loss_bce(zp, zn, summary, w_disc, n_real, tile_n):
    """zp/zn: (N_pad, H) bf16, summary: (1, H) f32, w_disc: (H, H) bf16 -> scalar."""
    n_pad, h = zp.shape
    grid = (n_pad // tile_n,)
    kernel = functools.partial(_loss_kernel, n_real=n_real, tile_n=tile_n)
    vmem_hint = 2 * tile_n * (2 * h * 2) + h * h * 2 + 16 * h * 4
    out = pl.pallas_call(
        kernel,
        out_shape=jax.ShapeDtypeStruct((1, 1), jnp.float32),
        grid_spec=pltpu.PrefetchScalarGridSpec(
            num_scalar_prefetch=0,
            grid=grid,
            in_specs=[
                pl.BlockSpec((tile_n, h), lambda i: (i, 0)),
                pl.BlockSpec((tile_n, h), lambda i: (i, 0)),
                pl.BlockSpec((1, h), lambda i: (0, 0)),
                pl.BlockSpec((h, h), lambda i: (0, 0)),
            ],
            out_specs=pl.BlockSpec((1, 1), lambda i: (0, 0)),
            scratch_shapes=[pltpu.VMEM((1, h), jnp.bfloat16),
                            pltpu.VMEM((1, 1), jnp.float32)],
        ),
        compiler_params=_compiler_params(vmem_hint),
    )(zp, zn, summary, w_disc)
    return out[0, 0]


# --------------------------------- model glue ------------------------------- #

class GraphLocalInfomaxPallas:
    """Forward-pass-equivalent re-implementation of GraphLocalInfomax (bce path).

    forward(x_dict, edge_index_dict, edge_attr_dict, key)
        -> (pos_z_dict, neg_z_dict, summary_dict)
      pos_z / neg_z are returned as ROW-PADDED bf16 arrays (N rounded up to a
      multiple of tile_n) so loss() can consume them without an extra HBM
      slice + re-pad round trip; slice [:n] for exact-N embeddings.
    loss(pos_z_dict, neg_z_dict, summary_dict) -> scalar
    """

    def __init__(self, hidden_channels, node_types, in_dims, key,
                 dropout=0.5, loss_type="bce", temperature=1.0, tile_n=512):
        self.hidden_channels = hidden_channels
        self.node_types = list(node_types)
        self.loss_type = loss_type
        self.temperature = temperature
        self.tile_n = tile_n
        self._num_real = {}                      # set in forward()

        self.enc_w, self.enc_b, self.disc_w = {}, {}, {}
        bound_disc = 1.0 / math.sqrt(hidden_channels)     # uniform(size, tensor)
        for nt in self.node_types:
            key, k1, k2, k3 = jax.random.split(key, 4)
            fin = in_dims[nt]
            bound_enc = 1.0 / math.sqrt(fin)
            self.enc_w[nt] = jax.random.uniform(
                k1, (fin, hidden_channels), jnp.float32, -bound_enc, bound_enc)
            self.enc_b[nt] = jax.random.uniform(
                k2, (1, hidden_channels), jnp.float32, -bound_enc, bound_enc)
            self.disc_w[nt] = jax.random.uniform(
                k3, (hidden_channels, hidden_channels), jnp.float32,
                -bound_disc, bound_disc)

        # bf16 copies for the MXU operands (f32 masters kept for reference math).
        self.enc_w_bf16 = {nt: w.astype(jnp.bfloat16) for nt, w in self.enc_w.items()}
        self.disc_w_bf16 = {nt: w.astype(jnp.bfloat16) for nt, w in self.disc_w.items()}

    # -- corruption (row-permutation negatives; corruption_rate == 1.0 path) --
    def corruption(self, x_dict, edge_index_dict, key):
        corrupted = {}
        for nt, x in x_dict.items():
            key, sub = jax.random.split(key)
            corrupted[nt] = x[jax.random.permutation(sub, x.shape[0])]
        return corrupted, edge_index_dict

    def forward(self, x_dict, edge_index_dict, edge_attr_dict, key):
        corrupted_x_dict, _ = self.corruption(x_dict, edge_index_dict, key)
        pos_z, neg_z, summ = {}, {}, {}
        for nt, x in x_dict.items():
            n = x.shape[0]
            self._num_real[nt] = n
            # x stays f32; the bf16 cast happens inside the kernel.
            xp = _pad_rows(x, self.tile_n)
            xn = _pad_rows(corrupted_x_dict[nt], self.tile_n)
            zp, zn, s = _fused_forward(xp, xn, self.enc_w_bf16[nt],
                                       self.enc_b[nt], n, self.tile_n)
            pos_z[nt] = zp                      # padded bf16 (see class docstring)
            neg_z[nt] = zn
            # self.dropout(summary) — eval-mode dropout == identity.
            summ[nt] = s
        return pos_z, neg_z, summ

    def loss(self, pos_z_dict, neg_z_dict, summary_dict):
        total = 0.0
        num_types = 0
        for nt in pos_z_dict:
            if nt not in summary_dict or nt not in self.disc_w:
                continue
            zp = pos_z_dict[nt]
            zn = neg_z_dict[nt]
            n = self._num_real.get(nt, zp.shape[0])
            node_loss = _fused_loss_bce(zp, zn, summary_dict[nt],
                                        self.disc_w_bf16[nt], n, self.tile_n)
            total = total + node_loss
            num_types += 1
        return total / max(num_types, 1)


# ------------------------------ pure-JAX reference -------------------------- #

def _reference(model, x_dict, edge_index_dict, key):
    corrupted, _ = model.corruption(x_dict, edge_index_dict, key)
    pos_z, neg_z, summ = {}, {}, {}
    for nt, x in x_dict.items():
        w, b = model.enc_w[nt], model.enc_b[nt]
        zp = jnp.maximum(x @ w + b, 0.0)
        zn = jnp.maximum(corrupted[nt] @ w + b, 0.0)
        pos_z[nt], neg_z[nt] = zp, zn
        summ[nt] = jax.nn.sigmoid(jnp.mean(zp, axis=0, keepdims=True))
    total, k = 0.0, 0
    for nt in pos_z:
        st = summ[nt] @ model.disc_w[nt]
        ps = jnp.sum(pos_z[nt] * st, axis=1)
        ns = jnp.sum(neg_z[nt] * st, axis=1)
        total = total + (-(jax.nn.log_sigmoid(ps) + jax.nn.log_sigmoid(-ns)).mean())
        k += 1
    return pos_z, neg_z, summ, total / max(k, 1)


# ------------------------------------ main ----------------------------------- #

if __name__ == "__main__":
    key = jax.random.PRNGKey(0)
    hidden = 128                       # lane-aligned hidden dim (128 lanes)
    node_types = ("author", "paper")
    in_dims = {"author": 128, "paper": 128}
    num_nodes = {"author": 640, "paper": 1152}   # exercises multi-tile grid + remainder mask
    tile_n = 512                       # mem-bound kernels want 512-1024 row tiles

    key, kp = jax.random.split(key)
    model = GraphLocalInfomaxPallas(hidden, node_types, in_dims, kp,
                                    dropout=0.5, loss_type="bce",
                                    temperature=1.0, tile_n=tile_n)

    x_dict = {}
    for nt in node_types:
        key, sub = jax.random.split(key)
        x_dict[nt] = jax.random.normal(sub, (num_nodes[nt], in_dims[nt]), jnp.float32)

    # Dummy edge structures (ignored by the synthetic encoder/summary).
    edge_index_dict = {("author", "writes", "paper"): jnp.zeros((2, 8), jnp.int32)}
    edge_attr_dict = {("author", "writes", "paper"): jnp.zeros((8, 4), jnp.float32)}

    key, kc = jax.random.split(key)
    pos_z, neg_z, summ = model.forward(x_dict, edge_index_dict, edge_attr_dict, kc)
    loss_val = model.loss(pos_z, neg_z, summ)

    for nt in node_types:
        jax.block_until_ready(pos_z[nt])
        jax.block_until_ready(neg_z[nt])
        jax.block_until_ready(summ[nt])
    jax.block_until_ready(loss_val)

    # Shape checks (pos_z/neg_z are row-padded to a multiple of tile_n; slice [:n]).
    for nt in node_types:
        n = num_nodes[nt]
        n_pad = -(-n // tile_n) * tile_n
        assert pos_z[nt].shape == (n_pad, hidden)
        assert neg_z[nt].shape == (n_pad, hidden)
        assert pos_z[nt][:n].shape == (n, hidden)
        assert summ[nt].shape == (1, hidden)
    assert loss_val.shape == ()

    # Numerical check vs. f32 pure-JAX reference (bf16 MXU operands + bf16 z storage
    # => loose tol).
    rp, rn, rs, rl = _reference(model, x_dict, edge_index_dict, kc)
    for nt in node_types:
        n = num_nodes[nt]
        assert jnp.allclose(pos_z[nt][:n].astype(jnp.float32), rp[nt],
                            rtol=5e-2, atol=5e-2)
        assert jnp.allclose(neg_z[nt][:n].astype(jnp.float32), rn[nt],
                            rtol=5e-2, atol=5e-2)
        assert jnp.allclose(summ[nt], rs[nt], rtol=5e-2, atol=5e-2)
    assert jnp.allclose(loss_val, rl, rtol=5e-2, atol=5e-2)

    print("KERNEL_OK")
</pallas_src>

<mosaic_0001>
module attributes {stable_mosaic.version = 11 : i64} {
  func.func @_fwd_kernel(%arg0: i32, %arg1: memref<512x128xf32, #tpu.memory_space<vmem>>, %arg2: memref<512x128xf32, #tpu.memory_space<vmem>>, %arg3: memref<128x128xbf16, #tpu.memory_space<vmem>>, %arg4: memref<1x128xf32, #tpu.memory_space<vmem>>, %arg5: memref<512x128xbf16, #tpu.memory_space<vmem>>, %arg6: memref<512x128xbf16, #tpu.memory_space<vmem>>, %arg7: memref<1x128xf32, #tpu.memory_space<vmem>>, %arg8: memref<1x128xf32, #tpu.memory_space<vmem>>) attributes {dimension_semantics = [#tpu.dimension_semantics<arbitrary>], iteration_bounds = array<i64: 2>, scalar_prefetch = 0 : i64, scratch_operands = 1 : i64, tpu.core_type = #tpu.core_type<tc>, window_params = [{transform_indices = @transform_0, window_bounds = array<i64: 512, 128>}, {transform_indices = @transform_1, window_bounds = array<i64: 512, 128>}, {pipeline_mode = #tpu.pipeline_mode<synchronous>, transform_indices = @transform_2, window_bounds = array<i64: 128, 128>}, {pipeline_mode = #tpu.pipeline_mode<synchronous>, transform_indices = @transform_3, window_bounds = array<i64: 1, 128>}, {transform_indices = @transform_4, window_bounds = array<i64: 512, 128>}, {transform_indices = @transform_5, window_bounds = array<i64: 512, 128>}, {pipeline_mode = #tpu.pipeline_mode<synchronous>, transform_indices = @transform_6, window_bounds = array<i64: 1, 128>}]} {
    %c0_i32 = arith.constant 0 : i32
    %0 = arith.cmpi eq, %arg0, %c0_i32 : i32
    %1 = arith.extui %0 : i1 to i32
    %c0_i32_0 = arith.constant 0 : i32
    %2 = arith.cmpi ne, %1, %c0_i32_0 : i32
    scf.if %2 {
      %cst_18 = arith.constant 0.000000e+00 : f32
      %30 = vector.broadcast %cst_18 : f32 to vector<1x128xf32>
      %c0_19 = arith.constant 0 : index
      %c0_20 = arith.constant 0 : index
      %31 = vector.load %arg8[%c0_19, %c0_20] : memref<1x128xf32, #tpu.memory_space<vmem>>, vector<1x128xf32>
      tpu.vector_store %arg8[%c0_19, %c0_20], %30 {strides = array<i32>} : memref<1x128xf32, #tpu.memory_space<vmem>>, vector<1x128xf32>,
    } else {
    }
    %c0 = arith.constant 0 : index
    %c0_1 = arith.constant 0 : index
    %3 = vector.load %arg1[%c0, %c0_1] : memref<512x128xf32, #tpu.memory_space<vmem>>, vector<512x128xf32>
    %4 = arith.truncf %3 : vector<512x128xf32> to vector<512x128xbf16>
    %c0_2 = arith.constant 0 : index
    %c0_3 = arith.constant 0 : index
    %5 = vector.load %arg2[%c0_2, %c0_3] : memref<512x128xf32, #tpu.memory_space<vmem>>, vector<512x128xf32>
    %6 = arith.truncf %5 : vector<512x128xf32> to vector<512x128xbf16>
    %7 = tpu.concatenate %4, %6 in 0 : vector<512x128xbf16>, vector<512x128xbf16> -> vector<1024x128xbf16>
    %c0_4 = arith.constant 0 : index
    %c0_5 = arith.constant 0 : index
    %8 = vector.load %arg3[%c0_4, %c0_5] : memref<128x128xbf16, #tpu.memory_space<vmem>>, vector<128x128xbf16>
    %cst = arith.constant dense<0.000000e+00> : vector<1024x128xf32>
    %9 = tpu.matmul %7, %8, %cst {dimension_numbers = #tpu.dot_dimension_numbers<[1], [0], [0], [1], [0, 0, 1, 1], [], []>} : vector<1024x128xbf16>, vector<128x128xbf16>, vector<1024x128xf32> -> vector<1024x128xf32>
    %c0_6 = arith.constant 0 : index
    %c0_7 = arith.constant 0 : index
    %10 = vector.load %arg4[%c0_6, %c0_7] : memref<1x128xf32, #tpu.memory_space<vmem>>, vector<1x128xf32>
    %11 = vector.broadcast %10 : vector<1x128xf32> to vector<1024x128xf32>
    %12 = arith.addf %9, %11 : vector<1024x128xf32>
    %cst_8 = arith.constant 0.000000e+00 : f32
    %13 = vector.broadcast %cst_8 : f32 to vector<1024x128xf32>
    %14 = arith.maximumf %12, %13 : vector<1024x128xf32>
    %15 = vector.extract_strided_slice %14 {offsets = [0, 0], sizes = [512, 128], strides = [1, 1]} : vector<1024x128xf32> to vector<512x128xf32>
    %16 = vector.extract_strided_slice %14 {offsets = [512, 0], sizes = [512, 128], strides = [1, 1]} : vector<1024x128xf32> to vector<512x128xf32>
    %17 = arith.truncf %15 : vector<512x128xf32> to vector<512x128xbf16>
    %c0_9 = arith.constant 0 : index
    %c0_10 = arith.constant 0 : index
    %18 = vector.load %arg5[%c0_9, %c0_10] : memref<512x128xbf16, #tpu.memory_space<vmem>>, vector<512x128xbf16>
    tpu.vector_store %arg5[%c0_9, %c0_10], %17 {strides = array<i32>} : memref<512x128xbf16, #tpu.memory_space<vmem>>, vector<512x128xbf16>,
    %19 = arith.truncf %16 : vector<512x128xf32> to vector<512x128xbf16>
    %c0_11 = arith.constant 0 : index
    %c0_12 = arith.constant 0 : index
    %20 = vector.load %arg6[%c0_11, %c0_12] : memref<512x128xbf16, #tpu.memory_space<vmem>>, vector<512x128xbf16>
    tpu.vector_store %arg6[%c0_11, %c0_12], %19 {strides = array<i32>} : memref<512x128xbf16, #tpu.memory_space<vmem>>, vector<512x128xbf16>,
    %c1_i32 = arith.constant 1 : i32
    %21 = arith.cmpi ne, %arg0, %c1_i32 : i32
    %22 = arith.extui %21 : i1 to i32
    %c0_i32_13 = arith.constant 0 : i32
    %23 = arith.cmpi ne, %22, %c0_i32_13 : i32
    scf.if %23 {
      %c0_18 = arith.constant 0 : index
      %c0_19 = arith.constant 0 : index
      %30 = vector.load %arg8[%c0_18, %c0_19] : memref<1x128xf32, #tpu.memory_space<vmem>>, vector<1x128xf32>
      %cst_20 = arith.constant dense<0.000000e+00> : vector<128xf32>
      %31 = vector.multi_reduction <add>, %15, %cst_20 [0] : vector<512x128xf32> to vector<128xf32>
      %32 = vector.shape_cast %31 : vector<128xf32> to vector<1x128xf32>
      %33 = arith.addf %30, %32 : vector<1x128xf32>
      %c0_21 = arith.constant 0 : index
      %c0_22 = arith.constant 0 : index
      %34 = vector.load %arg8[%c0_21, %c0_22] : memref<1x128xf32, #tpu.memory_space<vmem>>, vector<1x128xf32>
      tpu.vector_store %arg8[%c0_21, %c0_22], %33 {strides = array<i32>} : memref<1x128xf32, #tpu.memory_space<vmem>>, vector<1x128xf32>,
    } else {
    }
    %c1_i32_14 = arith.constant 1 : i32
    %24 = arith.cmpi eq, %arg0, %c1_i32_14 : i32
    %25 = arith.extui %24 : i1 to i32
    %c0_i32_15 = arith.constant 0 : i32
    %26 = arith.cmpi ne, %25, %c0_i32_15 : i32
    scf.if %26 {
      %30 = tpu.iota {dimensions = array<i32: 0>} : vector<512x1xi32>
      %c0_18 = arith.constant 0 : index
      %c0_19 = arith.constant 0 : index
      %31 = vector.load %arg8[%c0_18, %c0_19] : memref<1x128xf32, #tpu.memory_space<vmem>>, vector<1x128xf32>
      %c128_i32 = arith.constant 128 : i32
      %32 = vector.broadcast %c128_i32 : i32 to vector<512x1xi32>
      %33 = arith.cmpi slt, %30, %32 : vector<512x1xi32>
      %cst_20 = arith.constant 0.000000e+00 : f32
      %34 = vector.shape_cast %33 : vector<512x1xi1> to vector<512x1xi1>
      %35 = vector.broadcast %34 : vector<512x1xi1> to vector<512x128xi1>
      %36 = vector.broadcast %cst_20 : f32 to vector<512x128xf32>
      %37 = arith.select %35, %15, %36 : vector<512x128xi1>, vector<512x128xf32>
      %cst_21 = arith.constant dense<0.000000e+00> : vector<128xf32>
      %38 = vector.multi_reduction <add>, %37, %cst_21 [0] : vector<512x128xf32> to vector<128xf32>
      %39 = vector.shape_cast %38 : vector<128xf32> to vector<1x128xf32>
      %40 = arith.addf %31, %39 : vector<1x128xf32>
      %c0_22 = arith.constant 0 : index
      %c0_23 = arith.constant 0 : index
      %41 = vector.load %arg8[%c0_22, %c0_23] : memref<1x128xf32, #tpu.memory_space<vmem>>, vector<1x128xf32>
      tpu.vector_store %arg8[%c0_22, %c0_23], %40 {strides = array<i32>} : memref<1x128xf32, #tpu.memory_space<vmem>>, vector<1x128xf32>,
    } else {
    }
    %c1_i32_16 = arith.constant 1 : i32
    %27 = arith.cmpi eq, %arg0, %c1_i32_16 : i32
    %28 = arith.extui %27 : i1 to i32
    %c0_i32_17 = arith.constant 0 : i32
    %29 = arith.cmpi ne, %28, %c0_i32_17 : i32
    scf.if %29 {
      %c0_18 = arith.constant 0 : index
      %c0_19 = arith.constant 0 : index
      %30 = vector.load %arg8[%c0_18, %c0_19] : memref<1x128xf32, #tpu.memory_space<vmem>>, vector<1x128xf32>
      %cst_20 = arith.constant 6.400000e+02 : f32
      %31 = vector.broadcast %cst_20 : f32 to vector<1x128xf32>
      %32 = arith.divf %30, %31 : vector<1x128xf32>
      %33 = arith.negf %32 : vector<1x128xf32>
      %34 = math.exp %33 : vector<1x128xf32>
      %cst_21 = arith.constant 1.000000e+00 : f32
      %35 = vector.broadcast %cst_21 : f32 to vector<1x128xf32>
      %36 = arith.addf %35, %34 : vector<1x128xf32>
      %37 = arith.divf %35, %36 : vector<1x128xf32>
      %c0_22 = arith.constant 0 : index
      %c0_23 = arith.constant 0 : index
      %38 = vector.load %arg7[%c0_22, %c0_23] : memref<1x128xf32, #tpu.memory_space<vmem>>, vector<1x128xf32>
      tpu.vector_store %arg7[%c0_22, %c0_23], %37 {strides = array<i32>} : memref<1x128xf32, #tpu.memory_space<vmem>>, vector<1x128xf32>,
    } else {
    }
    return
  }
  func.func @transform_0(%arg0: i32) -> (i32, i32) {
    %c0_i32 = arith.constant 0 : i32
    %c0_i32_0 = arith.constant 0 : i32
    return %arg0, %c0_i32 : i32, i32
  }
  func.func @transform_1(%arg0: i32) -> (i32, i32) {
    %c0_i32 = arith.constant 0 : i32
    %c0_i32_0 = arith.constant 0 : i32
    return %arg0, %c0_i32 : i32, i32
  }
  func.func @transform_2(%arg0: i32) -> (i32, i32) {
    %c0_i32 = arith.constant 0 : i32
    %c0_i32_0 = arith.constant 0 : i32
    %c0_i32_1 = arith.constant 0 : i32
    return %c0_i32, %c0_i32_0 : i32, i32
  }
  func.func @transform_3(%arg0: i32) -> (i32, i32) {
    %c0_i32 = arith.constant 0 : i32
    %c0_i32_0 = arith.constant 0 : i32
    %c0_i32_1 = arith.constant 0 : i32
    return %c0_i32, %c0_i32_0 : i32, i32
  }
  func.func @transform_4(%arg0: i32) -> (i32, i32) {
    %c0_i32 = arith.constant 0 : i32
    %c0_i32_0 = arith.constant 0 : i32
    return %arg0, %c0_i32 : i32, i32
  }
  func.func @transform_5(%arg0: i32) -> (i32, i32) {
    %c0_i32 = arith.constant 0 : i32
    %c0_i32_0 = arith.constant 0 : i32
    return %arg0, %c0_i32 : i32, i32
  }
  func.func @transform_6(%arg0: i32) -> (i32, i32) {
    %c0_i32 = arith.constant 0 : i32
    %c0_i32_0 = arith.constant 0 : i32
    %c0_i32_1 = arith.constant 0 : i32
    return %c0_i32, %c0_i32_0 : i32, i32
  }
}

</mosaic_0001>

<llo_original>
// kernel: tpu_custom_call.1
$region0: #{tpu_custom_call.1}
  #allocation0 [shape = 'u32[]', space=smem, size = 0x4, offset = 0x4, fixed_abs, tag = 'smem constant byte address 0x4 - core index']
  #allocation1 [shape = 'u32[144,128]{1,0:T(1,128)}', space=vmem, size = 0x12000, scoped, tag = 'internal scratch']
  #allocation2 [shape = 'f32[1,128]{1,0:T(1,128)}', space=vmem, size = 0x200, scoped, tag = 'scratch operand']
  %s0 = inlined_call_operand.hbm [shape: f32[1024,128], index: 0, kind: input, shape index: {}]
  %s1 = inlined_call_operand.hbm [shape: f32[1024,128], index: 1, kind: input, shape index: {}]
  %s2 = inlined_call_operand.hbm [shape: bf16[128,128], index: 2, kind: input, shape index: {}]
  %s3 = inlined_call_operand.vmem [shape: f32[1,128], index: 3, kind: input, shape index: {}]
  %s4 = inlined_call_operand.hbm [shape: bf16[1024,128], index: 4, kind: output, shape index: {0}]
  %s5 = inlined_call_operand.hbm [shape: bf16[1024,128], index: 5, kind: output, shape index: {1}]
  %s6 = inlined_call_operand.hbm [shape: f32[1,128], index: 6, kind: output, shape index: {2}]
  %7 = xla_tuple %s4, %s5, %s6
  %s8 = sld [smem:[#allocation0]]
  $region89: #{tpu_custom_call.1} parent=0
    _
  %s10 = ssub.s32 1, %s8
  %s11 = scalar_select 0, %s10, %s8
  $region1: #{tpu_custom_call.1} parent=0
    #allocation3 [shape = 'u8[524288]{0}', space=vmem, size = 0x80000, scoped, tag = 'input window, operand 0']
    #allocation4 [shape = 's32[2]{0}', space=sflag, size = 0x8, scoped, tag = 'scoped memory for tpu_custom_call.1']
    #allocation5 [shape = 's32[2]{0}', space=sflag, size = 0x8, scoped, tag = 'scoped memory for tpu_custom_call.1']
    #allocation6 [shape = 'u8[524288]{0}', space=vmem, size = 0x80000, scoped, tag = 'input window, operand 1']
    #allocation7 [shape = 's32[2]{0}', space=sflag, size = 0x8, scoped, tag = 'scoped memory for tpu_custom_call.1']
    #allocation8 [shape = 'u8[32768]{0}', space=vmem, size = 0x8000, scoped, tag = 'input window, operand 2, single buffered']
    #allocation9 [shape = 'u8[262144]{0}', space=vmem, size = 0x40000, scoped, tag = 'output window, operand 0']
    #allocation10 [shape = 'u8[262144]{0}', space=vmem, size = 0x40000, scoped, tag = 'output window, operand 1']
    #allocation11 [shape = 's32[2]{0}', space=sflag, size = 0x8, scoped, tag = 'scoped memory for tpu_custom_call.1']
    #allocation12 [shape = 'u8[512]{0}', space=vmem, size = 0x400, scoped, tag = 'output window, operand 2, single buffered']
    %12 = vsyncpa [#allocation4], 0
    %s13 = scalar_lea.sflag [#allocation4], 1
    %14 = vsyncpa %s13, 0
    %15 = vsyncpa [#allocation7], 0
    %s16 = scalar_lea.sflag [#allocation7], 1
    %17 = vsyncpa %s16, 0
    %18 = vsyncpa [#allocation5], 0
    %s19 = scalar_lea.sflag [#allocation5], 1
    %20 = vsyncpa %s19, 0
    %21 = vsyncpa [#allocation11], 0
    %s22 = scalar_lea.sflag [#allocation11], 1
    %23 = vsyncpa %s22, 0
    loop: start=0, step=1, limit=4
    $region2: #{tpu_custom_call.1} parent=1 // loop_pre_header
      _
    $region3: #{tpu_custom_call.1} parent=1 // loop_header
      %s25 = sphi 0, %s29
      %p26 = scmp.ge.s32.totalorder %s25, 4
      %s35 = sphi 0, %s37
      %s38 = sphi 0, %s35
      %s39 = sphi 0, %s38
      %s55 = sphi 0, %s39
      %s61 = sphi 0, %s63
      %s64 = sphi 0, %s61
      %s65 = sphi 0, %s64
      %s81 = sphi 0, %s65
      %s85 = sphi 0, %s85
      %s87 = sphi 0, %s85
      %s88 = sphi 0, %s87
      %s102 = sphi 0, %s88
      %s106 = sphi 0, %s106
      %s108 = sphi 0, %s106
      %s109 = sphi 0, %s108
      %s123 = sphi 0, %s109
      %s129 = sphi 0, %s131
      %s132 = sphi 0, %s129
      %s133 = sphi 0, %s132
      %s149 = sphi 0, %s133
      %s155 = sphi 0, %s157
      %s158 = sphi 0, %s155
      %s159 = sphi 0, %s158
      %s175 = sphi 0, %s159
      %s179 = sphi 0, %s179
      %s181 = sphi 0, %s179
      %s182 = sphi 0, %s181
      %s196 = sphi 0, %s182
    $region4: #{tpu_custom_call.1} parent=1 // loop_header_branch
      %28 = sbr.rel (%p26) target = $region8
    $region5: #{tpu_custom_call.1} parent=1 // loop_body
      %s30 = ssub.s32 %s25, 1
      %s31 = ssub.s32 %s25, 2
      %s32 = sadd.s32 %s25, 1
      %s33 = ssub.s32 %s25, %s32
      %p34 = scmp.eq.s32.totalorder %s33, 0
      %s36 = sadd.s32 %s35, 1
      %s37 = scalar_select %p34, %s35, %s36
      %p40 = pneg %p34
      %p41 = scmp.eq.s32.totalorder %s25, 1
      %p42 = por %p40, %p41
      %p43 = scmp.ne.s32.totalorder %s35, %s38
      %p44 = scmp.eq.s32.totalorder %s25, 0
      %p45 = por %p43, %p44
      %p46 = scmp.ne.s32.totalorder %s35, %s38
      %p47 = scmp.eq.s32.totalorder %s30, 1
      %p48 = por %p46, %p47
      %p49 = scmp.ne.s32.totalorder %s38, %s39
      %p50 = scmp.eq.s32.totalorder %s30, 0
      %p51 = por %p49, %p50
      %p52 = scmp.ne.s32.totalorder %s38, %s39
      %p53 = scmp.eq.s32.totalorder %s31, 1
      %p54 = por %p52, %p53
      %p56 = scmp.ne.s32.totalorder %s39, %s55
      %p57 = scmp.eq.s32.totalorder %s31, 0
      %p58 = por %p56, %p57
      %s59 = ssub.s32 %s25, %s32
      %p60 = scmp.eq.s32.totalorder %s59, 0
      %s62 = sadd.s32 %s61, 1
      %s63 = scalar_select %p60, %s61, %s62
      %p66 = pneg %p60
      %p67 = scmp.eq.s32.totalorder %s25, 1
      %p68 = por %p66, %p67
      %p69 = scmp.ne.s32.totalorder %s61, %s64
      %p70 = scmp.eq.s32.totalorder %s25, 0
      %p71 = por %p69, %p70
      %p72 = scmp.ne.s32.totalorder %s61, %s64
      %p73 = scmp.eq.s32.totalorder %s30, 1
      %p74 = por %p72, %p73
      %p75 = scmp.ne.s32.totalorder %s64, %s65
      %p76 = scmp.eq.s32.totalorder %s30, 0
      %p77 = por %p75, %p76
      %p78 = scmp.ne.s32.totalorder %s64, %s65
      %p79 = scmp.eq.s32.totalorder %s31, 1
      %p80 = por %p78, %p79
      %p82 = scmp.ne.s32.totalorder %s65, %s81
      %p83 = scmp.eq.s32.totalorder %s31, 0
      %p84 = por %p82, %p83
      %s86 = sadd.s32 %s85, 1
      %p89 = scmp.eq.s32.totalorder %s25, 1
      %p90 = scmp.ne.s32.totalorder %s85, %s87
      %p91 = scmp.eq.s32.totalorder %s25, 0
      %p92 = por %p90, %p91
      %p93 = scmp.ne.s32.totalorder %s85, %s87
      %p94 = scmp.eq.s32.totalorder %s30, 1
      %p95 = por %p93, %p94
      %p96 = scmp.ne.s32.totalorder %s87, %s88
      %p97 = scmp.eq.s32.totalorder %s30, 0
      %p98 = por %p96, %p97
      %p99 = scmp.ne.s32.totalorder %s87, %s88
      %p100 = scmp.eq.s32.totalorder %s31, 1
      %p101 = por %p99, %p100
      %p103 = scmp.ne.s32.totalorder %s88, %s102
      %p104 = scmp.eq.s32.totalorder %s31, 0
      %p105 = por %p103, %p104
      %s107 = sadd.s32 %s106, 1
      %p110 = scmp.eq.s32.totalorder %s25, 1
      %p111 = scmp.ne.s32.totalorder %s106, %s108
      %p112 = scmp.eq.s32.totalorder %s25, 0
      %p113 = por %p111, %p112
      %p114 = scmp.ne.s32.totalorder %s106, %s108
      %p115 = scmp.eq.s32.totalorder %s30, 1
      %p116 = por %p114, %p115
      %p117 = scmp.ne.s32.totalorder %s108, %s109
      %p118 = scmp.eq.s32.totalorder %s30, 0
      %p119 = por %p117, %p118
      %p120 = scmp.ne.s32.totalorder %s108, %s109
      %p121 = scmp.eq.s32.totalorder %s31, 1
      %p122 = por %p120, %p121
      %p124 = scmp.ne.s32.totalorder %s109, %s123
      %p125 = scmp.eq.s32.totalorder %s31, 0
      %p126 = por %p124, %p125
      %s127 = ssub.s32 %s25, %s32
      %p128 = scmp.eq.s32.totalorder %s127, 0
      %s130 = sadd.s32 %s129, 1
      %s131 = scalar_select %p128, %s129, %s130
      %p134 = pneg %p128
      %p135 = scmp.eq.s32.totalorder %s25, 1
      %p136 = por %p134, %p135
      %p137 = scmp.ne.s32.totalorder %s129, %s132
      %p138 = scmp.eq.s32.totalorder %s25, 0
      %p139 = por %p137, %p138
      %p140 = scmp.ne.s32.totalorder %s129, %s132
      %p141 = scmp.eq.s32.totalorder %s30, 1
      %p142 = por %p140, %p141
      %p143 = scmp.ne.s32.totalorder %s132, %s133
      %p144 = scmp.eq.s32.totalorder %s30, 0
      %p145 = por %p143, %p144
      %p146 = scmp.ne.s32.totalorder %s132, %s133
      %p147 = scmp.eq.s32.totalorder %s31, 1
      %p148 = por %p146, %p147
      %p150 = scmp.ne.s32.totalorder %s133, %s149
      %p151 = scmp.eq.s32.totalorder %s31, 0
      %p152 = por %p150, %p151
      %s153 = ssub.s32 %s25, %s32
      %p154 = scmp.eq.s32.totalorder %s153, 0
      %s156 = sadd.s32 %s155, 1
      %s157 = scalar_select %p154, %s155, %s156
      %p160 = pneg %p154
      %p161 = scmp.eq.s32.totalorder %s25, 1
      %p162 = por %p160, %p161
      %p163 = scmp.ne.s32.totalorder %s155, %s158
      %p164 = scmp.eq.s32.totalorder %s25, 0
      %p165 = por %p163, %p164
      %p166 = scmp.ne.s32.totalorder %s155, %s158
      %p167 = scmp.eq.s32.totalorder %s30, 1
      %p168 = por %p166, %p167
      %p169 = scmp.ne.s32.totalorder %s158, %s159
      %p170 = scmp.eq.s32.totalorder %s30, 0
      %p171 = por %p169, %p170
      %p172 = scmp.ne.s32.totalorder %s158, %s159
      %p173 = scmp.eq.s32.totalorder %s31, 1
      %p174 = por %p172, %p173
      %p176 = scmp.ne.s32.totalorder %s159, %s175
      %p177 = scmp.eq.s32.totalorder %s31, 0
      %p178 = por %p176, %p177
      %s180 = sadd.s32 %s179, 1
      %p183 = scmp.eq.s32.totalorder %s25, 1
      %p184 = scmp.ne.s32.totalorder %s179, %s181
      %p185 = scmp.eq.s32.totalorder %s25, 0
      %p186 = por %p184, %p185
      %p187 = scmp.ne.s32.totalorder %s179, %s181
      %p188 = scmp.eq.s32.totalorder %s30, 1
      %p189 = por %p187, %p188
      %p190 = scmp.ne.s32.totalorder %s181, %s182
      %p191 = scmp.eq.s32.totalorder %s30, 0
      %p192 = por %p190, %p191
      %p193 = scmp.ne.s32.totalorder %s181, %s182
      %p194 = scmp.eq.s32.totalorder %s31, 1
      %p195 = por %p193, %p194
      %p197 = scmp.ne.s32.totalorder %s182, %s196
      %p198 = scmp.eq.s32.totalorder %s31, 0
      %p199 = por %p197, %p198
      %p200 = scmp.le.s32.totalorder 1, %s25
      %p201 = scmp.lt.s32.totalorder %s25, 3
      %p202 = pnand %p200, %p201
      %p203 = pneg %p202
      // Predicated region
      $region9: #{tpu_custom_call.1} parent=5 // pred_check
        _
      $region10: #{tpu_custom_call.1} parent=5 // pred_check_branch
        %205 = sbr.rel (%p202) target = $region12
      $region11: #{tpu_custom_call.1} parent=5 // pred_region
        %s206 = ssub.s32 %s25, 1
        // Predicated region
        $region13: #{tpu_custom_call.1} parent=11 // pred_check
          %p207 = pneg %p98
        $region14: #{tpu_custom_call.1} parent=11 // pred_check_branch
          %209 = sbr.rel (%p207) target = $region16
        $region15: #{tpu_custom_call.1} parent=11 // pred_region
          %s211 = ssub.s32 1024, 1024
          %212 = vsyncadd [#allocation7], %s211
          %s213 = sshll.u32 [#allocation8], 4
          %s214 = int_to_ptr.vmem [resolvable:$true] %s213
          %219 = dma.hbm_to_vmem [thread:$0]  %s2, 1024, %s214, [#allocation7], 64, 64, 4
        $region16: #{tpu_custom_call.1} parent=11 // pred_fallthru
          _
        // Predicated region
        $region17: #{tpu_custom_call.1} parent=11 // pred_check
          %p220 = pneg %p119
        $region18: #{tpu_custom_call.1} parent=11 // pred_check_branch
          %222 = sbr.rel (%p220) target = $region20
        $region19: #{tpu_custom_call.1} parent=11 // pred_region
          _
        $region20: #{tpu_custom_call.1} parent=11 // pred_fallthru
          _
      $region12: #{tpu_custom_call.1} parent=5 // pred_fallthru
        _
      %p223 = scmp.lt.s32.totalorder %s25, 2
      // Predicated region
      $region21: #{tpu_custom_call.1} parent=5 // pred_check
        %p224 = pneg %p223
      $region22: #{tpu_custom_call.1} parent=5 // pred_check_branch
        %226 = sbr.rel (%p224) target = $region24
      $region23: #{tpu_custom_call.1} parent=5 // pred_region
        // Predicated region
        $region25: #{tpu_custom_call.1} parent=23 // pred_check
          %p227 = pneg %p45
        $region26: #{tpu_custom_call.1} parent=23 // pred_check_branch
          %229 = sbr.rel (%p227) target = $region28
        $region27: #{tpu_custom_call.1} parent=23 // pred_region
          %s230 = sand.u32 %s35, 1
          %s231 = scalar_lea.sflag [#allocation4], %s230
          %s232 = sand.u32 %s35, 1
          %s233 = smul.addr %s232, 512
          %s234 = scalar_lea.vmem [#allocation3], %s233
          %s235 = smul.u32 64, %s25
          %s237 = ssub.s32 8192, 8192
          %238 = vsyncadd %s231, %s237
          %s239 = smul.addr %s235, 128
          %s240 = scalar_lea.hbm %s0, %s239
          %s241 = sshll.u32 %s234, 4
          %s242 = int_to_ptr.vmem [resolvable:$true] %s241
          %247 = dma.hbm_to_vmem [thread:$0]  %s240, 8192, %s242, %s231, 128, 128, 8
        $region28: #{tpu_custom_call.1} parent=23 // pred_fallthru
          _
        // Predicated region
        $region29: #{tpu_custom_call.1} parent=23 // pred_check
          %p248 = pneg %p71
        $region30: #{tpu_custom_call.1} parent=23 // pred_check_branch
          %250 = sbr.rel (%p248) target = $region32
        $region31: #{tpu_custom_call.1} parent=23 // pred_region
          %s251 = sand.u32 %s25, 1
          %s252 = scalar_lea.sflag [#allocation7], %s251
          %s253 = sand.u32 %s61, 1
          %s254 = smul.addr %s253, 512
          %s255 = scalar_lea.vmem [#allocation6], %s254
          %s256 = smul.u32 64, %s25
          %s258 = ssub.s32 8192, 8192
          %259 = vsyncadd %s252, %s258
          %s260 = smul.addr %s256, 128
          %s261 = scalar_lea.hbm %s1, %s260
          %s262 = sshll.u32 %s255, 4
          %s263 = int_to_ptr.vmem [resolvable:$true] %s262
          %268 = dma.hbm_to_vmem [thread:$0]  %s261, 8192, %s263, %s252, 128, 128, 8
        $region32: #{tpu_custom_call.1} parent=23 // pred_fallthru
          _
      $region24: #{tpu_custom_call.1} parent=5 // pred_fallthru
        _
      %p269 = scmp.le.s32.totalorder 1, %s25
      %p270 = scmp.lt.s32.totalorder %s25, 3
      %p271 = pnand %p269, %p270
      %p272 = pneg %p271
      // Predicated region
      $region33: #{tpu_custom_call.1} parent=5 // pred_check
        _
      $region34: #{tpu_custom_call.1} parent=5 // pred_check_branch
        %274 = sbr.rel (%p271) target = $region36
      $region35: #{tpu_custom_call.1} parent=5 // pred_region
        %s275 = ssub.s32 %s25, 1
        %s276 = sand.u32 %s38, 1
        %s277 = scalar_lea.sflag [#allocation4], %s276
        %s278 = sand.u32 %s38, 1
        %s279 = smul.addr %s278, 512
        %s280 = scalar_lea.vmem [#allocation3], %s279
        // Predicated region
        $region37: #{tpu_custom_call.1} parent=35 // pred_check
          %p281 = pneg %p51
        $region38: #{tpu_custom_call.1} parent=35 // pred_check_branch
          %283 = sbr.rel (%p281) target = $region40
        $region39: #{tpu_custom_call.1} parent=35 // pred_region
          %284 = dma.done %s277, 8192
        $region40: #{tpu_custom_call.1} parent=35 // pred_fallthru
          _
        %s285 = sand.u32 %s30, 1
        %s286 = scalar_lea.sflag [#allocation7], %s285
        %s287 = sand.u32 %s64, 1
        %s288 = smul.addr %s287, 512
        %s289 = scalar_lea.vmem [#allocation6], %s288
        // Predicated region
        $region41: #{tpu_custom_call.1} parent=35 // pred_check
          %p290 = pneg %p77
        $region42: #{tpu_custom_call.1} parent=35 // pred_check_branch
          %292 = sbr.rel (%p290) target = $region44
        $region43: #{tpu_custom_call.1} parent=35 // pred_region
          %293 = dma.done %s286, 8192
        $region44: #{tpu_custom_call.1} parent=35 // pred_fallthru
          _
        // Predicated region
        $region45: #{tpu_custom_call.1} parent=35 // pred_check
          %p294 = pneg %p98
        $region46: #{tpu_custom_call.1} parent=35 // pred_check_branch
          %296 = sbr.rel (%p294) target = $region48
        $region47: #{tpu_custom_call.1} parent=35 // pred_region
          %297 = dma.done [#allocation7], 1024
        $region48: #{tpu_custom_call.1} parent=35 // pred_fallthru
          _
        %s298 = sand.u32 %s38, 1
        %s299 = scalar_lea.sflag [#allocation4], %s298
        %s300 = sand.u32 %s38, 1
        %s301 = smul.addr %s300, 512
        %s302 = scalar_lea.vmem [#allocation3], %s301
        %p303 = pneg %p51
        %p304 = pneg %p48
        %s305 = sand.u32 %s30, 1
        %s306 = scalar_lea.sflag [#allocation7], %s305
        %s307 = sand.u32 %s64, 1
        %s308 = smul.addr %s307, 512
        %s309 = scalar_lea.vmem [#allocation6], %s308
        %p310 = pneg %p77
        %p311 = pneg %p74
        %p312 = pneg %p98
        %p313 = pneg %p95
        %p314 = pneg %p119
        %p315 = pneg %p116
        %p316 = pneg %p145
        %p317 = pneg %p142
        %s318 = sand.u32 %s132, 1
        %s319 = scalar_lea.sflag [#allocation5], %s318
        %s320 = sand.u32 %s132, 1
        %s321 = smul.addr %s320, 256
        %s322 = scalar_lea.vmem [#allocation9], %s321
        %p323 = pneg %p171
        %p324 = pneg %p168
        %s325 = sand.u32 %s30, 1
        %s326 = scalar_lea.sflag [#allocation11], %s325
        %s327 = sand.u32 %s158, 1
        %s328 = smul.addr %s327, 256
        %s329 = scalar_lea.vmem [#allocation10], %s328
        %p330 = pneg %p192
        %p331 = pneg %p189
        %s332 = smul.u32 64, %s30
        %s333 = smul.u32 64, %s30
        %s334 = smul.u32 64, %s30
        %s335 = smul.u32 64, %s30
        %p337 = scmp.eq.s32.totalorder %s30, 0
        // Predicated region
        $region49: #{tpu_custom_call.1} parent=35 // pred_check
          %p338 = pneg %p337
        $region50: #{tpu_custom_call.1} parent=35 // pred_check_branch
          %340 = sbr.rel (%p338) target = $region52
        $region51: #{tpu_custom_call.1} parent=35 // pred_region
          %341 = vst [vmem:[#allocation2] sm:$0x1] 0.0
        $region52: #{tpu_custom_call.1} parent=35 // pred_fallthru
          _
        %v342 = vld [vmem:[%s280] sm:$0xff]
        %v343 = vld [vmem:[%s280 + $0x8] sm:$0xff]
        %v344 = vld [vmem:[%s280 + $0x10] sm:$0xff]
        %v345 = vld [vmem:[%s280 + $0x18] sm:$0xff]
        %v346 = vld [vmem:[%s280 + $0x20] sm:$0xff]
        %v347 = vld [vmem:[%s280 + $0x28] sm:$0xff]
        %v348 = vld [vmem:[%s280 + $0x30] sm:$0xff]
        %v349 = vld [vmem:[%s280 + $0x38] sm:$0xff]
        %v350 = vld [vmem:[%s280 + $0x40] sm:$0xff]
        %v351 = vld [vmem:[%s280 + $0x48] sm:$0xff]
        %v352 = vld [vmem:[%s280 + $0x50] sm:$0xff]
        %v353 = vld [vmem:[%s280 + $0x58] sm:$0xff]
        %v354 = vld [vmem:[%s280 + $0x60] sm:$0xff]
        %v355 = vld [vmem:[%s280 + $0x68] sm:$0xff]
        %v356 = vld [vmem:[%s280 + $0x70] sm:$0xff]
        %v357 = vld [vmem:[%s280 + $0x78] sm:$0xff]
        %v358 = vld [vmem:[%s280 + $0x80] sm:$0xff]
        %v359 = vld [vmem:[%s280 + $0x88] sm:$0xff]
        %v360 = vld [vmem:[%s280 + $0x90] sm:$0xff]
        %v361 = vld [vmem:[%s280 + $0x98] sm:$0xff]
        %v362 = vld [vmem:[%s280 + $0xa0] sm:$0xff]
        %v363 = vld [vmem:[%s280 + $0xa8] sm:$0xff]
        %v364 = vld [vmem:[%s280 + $0xb0] sm:$0xff]
        %v365 = vld [vmem:[%s280 + $0xb8] sm:$0xff]
        %v366 = vld [vmem:[%s280 + $0xc0] sm:$0xff]
        %v367 = vld [vmem:[%s280 + $0xc8] sm:$0xff]
        %v368 = vld [vmem:[%s280 + $0xd0] sm:$0xff]
        %v369 = vld [vmem:[%s280 + $0xd8] sm:$0xff]
        %v370 = vld [vmem:[%s280 + $0xe0] sm:$0xff]
        %v371 = vld [vmem:[%s280 + $0xe8] sm:$0xff]
        %v372 = vld [vmem:[%s280 + $0xf0] sm:$0xff]
        %v373 = vld [vmem:[%s280 + $0xf8] sm:$0xff]
        %v374 = vld [vmem:[%s280 + $0x100] sm:$0xff]
        %v375 = vld [vmem:[%s280 + $0x108] sm:$0xff]
        %v376 = vld [vmem:[%s280 + $0x110] sm:$0xff]
        %v377 = vld [vmem:[%s280 + $0x118] sm:$0xff]
        %v378 = vld [vmem:[%s280 + $0x120] sm:$0xff]
        %v379 = vld [vmem:[%s280 + $0x128] sm:$0xff]
        %v380 = vld [vmem:[%s280 + $0x130] sm:$0xff]
        %v381 = vld [vmem:[%s280 + $0x138] sm:$0xff]
        %v382 = vld [vmem:[%s280 + $0x140] sm:$0xff]
        %v383 = vld [vmem:[%s280 + $0x148] sm:$0xff]
        %v384 = vld [vmem:[%s280 + $0x150] sm:$0xff]
        %v385 = vld [vmem:[%s280 + $0x158] sm:$0xff]
        %v386 = vld [vmem:[%s280 + $0x160] sm:$0xff]
        %v387 = vld [vmem:[%s280 + $0x168] sm:$0xff]
        %v388 = vld [vmem:[%s280 + $0x170] sm:$0xff]
        %v389 = vld [vmem:[%s280 + $0x178] sm:$0xff]
        %v390 = vld [vmem:[%s280 + $0x180] sm:$0xff]
        %v391 = vld [vmem:[%s280 + $0x188] sm:$0xff]
        %v392 = vld [vmem:[%s280 + $0x190] sm:$0xff]
        %v393 = vld [vmem:[%s280 + $0x198] sm:$0xff]
        %v394 = vld [vmem:[%s280 + $0x1a0] sm:$0xff]
        %v395 = vld [vmem:[%s280 + $0x1a8] sm:$0xff]
        %v396 = vld [vmem:[%s280 + $0x1b0] sm:$0xff]
        %v397 = vld [vmem:[%s280 + $0x1b8] sm:$0xff]
        %v398 = vld [vmem:[%s280 + $0x1c0] sm:$0xff]
        %v399 = vld [vmem:[%s280 + $0x1c8] sm:$0xff]
        %v400 = vld [vmem:[%s280 + $0x1d0] sm:$0xff]
        %v401 = vld [vmem:[%s280 + $0x1d8] sm:$0xff]
        %v402 = vld [vmem:[%s280 + $0x1e0] sm:$0xff]
        %v403 = vld [vmem:[%s280 + $0x1e8] sm:$0xff]
        %v404 = vld [vmem:[%s280 + $0x1f0] sm:$0xff]
        %v405 = vld [vmem:[%s280 + $0x1f8] sm:$0xff]
        %v406 = vpack.c.bf16 %v343, %v342
        %v407 = vpack.c.bf16 %v345, %v344
        %v408 = vpack.c.bf16 %v347, %v346
        %v409 = vpack.c.bf16 %v349, %v348
        %v410 = vpack.c.bf16 %v351, %v350
        %v411 = vpack.c.bf16 %v353, %v352
        %v412 = vpack.c.bf16 %v355, %v354
        %v413 = vpack.c.bf16 %v357, %v356
        %v414 = vpack.c.bf16 %v359, %v358
        %v415 = vpack.c.bf16 %v361, %v360
        %v416 = vpack.c.bf16 %v363, %v362
        %v417 = vpack.c.bf16 %v365, %v364
        %v418 = vpack.c.bf16 %v367, %v366
        %v419 = vpack.c.bf16 %v369, %v368
        %v420 = vpack.c.bf16 %v371, %v370
        %v421 = vpack.c.bf16 %v373, %v372
        %v422 = vpack.c.bf16 %v375, %v374
        %v423 = vpack.c.bf16 %v377, %v376
        %v424 = vpack.c.bf16 %v379, %v378
        %v425 = vpack.c.bf16 %v381, %v380
        %v426 = vpack.c.bf16 %v383, %v382
        %v427 = vpack.c.bf16 %v385, %v384
        %v428 = vpack.c.bf16 %v387, %v386
        %v429 = vpack.c.bf16 %v389, %v388
        %v430 = vpack.c.bf16 %v391, %v390
        %v431 = vpack.c.bf16 %v393, %v392
        %v432 = vpack.c.bf16 %v395, %v394
        %v433 = vpack.c.bf16 %v397, %v396
        %v434 = vpack.c.bf16 %v399, %v398
        %v435 = vpack.c.bf16 %v401, %v400
        %v436 = vpack.c.bf16 %v403, %v402
        %v437 = vpack.c.bf16 %v405, %v404
        %v438 = vld [vmem:[%s289] sm:$0xff]
        %v439 = vld [vmem:[%s289 + $0x8] sm:$0xff]
        %v440 = vld [vmem:[%s289 + $0x10] sm:$0xff]
        %v441 = vld [vmem:[%s289 + $0x18] sm:$0xff]
        %v442 = vld [vmem:[%s289 + $0x20] sm:$0xff]
        %v443 = vld [vmem:[%s289 + $0x28] sm:$0xff]
        %v444 = vld [vmem:[%s289 + $0x30] sm:$0xff]
        %v445 = vld [vmem:[%s289 + $0x38] sm:$0xff]
        %v446 = vld [vmem:[%s289 + $0x40] sm:$0xff]
        %v447 = vld [vmem:[%s289 + $0x48] sm:$0xff]
        %v448 = vld [vmem:[%s289 + $0x50] sm:$0xff]
        %v449 = vld [vmem:[%s289 + $0x58] sm:$0xff]
        %v450 = vld [vmem:[%s289 + $0x60] sm:$0xff]
        %v451 = vld [vmem:[%s289 + $0x68] sm:$0xff]
        %v452 = vld [vmem:[%s289 + $0x70] sm:$0xff]
        %v453 = vld [vmem:[%s289 + $0x78] sm:$0xff]
        %v454 = vld [vmem:[%s289 + $0x80] sm:$0xff]
        %v455 = vld [vmem:[%s289 + $0x88] sm:$0xff]
        %v456 = vld [vmem:[%s289 + $0x90] sm:$0xff]
        %v457 = vld [vmem:[%s289 + $0x98] sm:$0xff]
        %v458 = vld [vmem:[%s289 + $0xa0] sm:$0xff]
        %v459 = vld [vmem:[%s289 + $0xa8] sm:$0xff]
        %v460 = vld [vmem:[%s289 + $0xb0] sm:$0xff]
        %v461 = vld [vmem:[%s289 + $0xb8] sm:$0xff]
        %v462 = vld [vmem:[%s289 + $0xc0] sm:$0xff]
        %v463 = vld [vmem:[%s289 + $0xc8] sm:$0xff]
        %v464 = vld [vmem:[%s289 + $0xd0] sm:$0xff]
        %v465 = vld [vmem:[%s289 + $0xd8] sm:$0xff]
        %v466 = vld [vmem:[%s289 + $0xe0] sm:$0xff]
        %v467 = vld [vmem:[%s289 + $0xe8] sm:$0xff]
        %v468 = vld [vmem:[%s289 + $0xf0] sm:$0xff]
        %v469 = vld [vmem:[%s289 + $0xf8] sm:$0xff]
        %v470 = vld [vmem:[%s289 + $0x100] sm:$0xff]
        %v471 = vld [vmem:[%s289 + $0x108] sm:$0xff]
        %v472 = vld [vmem:[%s289 + $0x110] sm:$0xff]
        %v473 = vld [vmem:[%s289 + $0x118] sm:$0xff]
        %v474 = vld [vmem:[%s289 + $0x120] sm:$0xff]
        %v475 = vld [vmem:[%s289 + $0x128] sm:$0xff]
        %v476 = vld [vmem:[%s289 + $0x130] sm:$0xff]
        %v477 = vld [vmem:[%s289 + $0x138] sm:$0xff]
        %v478 = vld [vmem:[%s289 + $0x140] sm:$0xff]
        %v479 = vld [vmem:[%s289 + $0x148] sm:$0xff]
        %v480 = vld [vmem:[%s289 + $0x150] sm:$0xff]
        %v481 = vld [vmem:[%s289 + $0x158] sm:$0xff]
        %v482 = vld [vmem:[%s289 + $0x160] sm:$0xff]
        %v483 = vld [vmem:[%s289 + $0x168] sm:$0xff]
        %v484 = vld [vmem:[%s289 + $0x170] sm:$0xff]
        %v485 = vld [vmem:[%s289 + $0x178] sm:$0xff]
        %v486 = vld [vmem:[%s289 + $0x180] sm:$0xff]
        %v487 = vld [vmem:[%s289 + $0x188] sm:$0xff]
        %v488 = vld [vmem:[%s289 + $0x190] sm:$0xff]
        %v489 = vld [vmem:[%s289 + $0x198] sm:$0xff]
        %v490 = vld [vmem:[%s289 + $0x1a0] sm:$0xff]
        %v491 = vld [vmem:[%s289 + $0x1a8] sm:$0xff]
        %v492 = vld [vmem:[%s289 + $0x1b0] sm:$0xff]
        %v493 = vld [vmem:[%s289 + $0x1b8] sm:$0xff]
        %v494 = vld [vmem:[%s289 + $0x1c0] sm:$0xff]
        %v495 = vld [vmem:[%s289 + $0x1c8] sm:$0xff]
        %v496 = vld [vmem:[%s289 + $0x1d0] sm:$0xff]
        %v497 = vld [vmem:[%s289 + $0x1d8] sm:$0xff]
        %v498 = vld [vmem:[%s289 + $0x1e0] sm:$0xff]
        %v499 = vld [vmem:[%s289 + $0x1e8] sm:$0xff]
        %v500 = vld [vmem:[%s289 + $0x1f0] sm:$0xff]
        %v501 = vld [vmem:[%s289 + $0x1f8] sm:$0xff]
        %v502 = vpack.c.bf16 %v439, %v438
        %v503 = vpack.c.bf16 %v441, %v440
        %v504 = vpack.c.bf16 %v443, %v442
        %v505 = vpack.c.bf16 %v445, %v444
        %v506 = vpack.c.bf16 %v447, %v446
        %v507 = vpack.c.bf16 %v449, %v448
        %v508 = vpack.c.bf16 %v451, %v450
        %v509 = vpack.c.bf16 %v453, %v452
        %v510 = vpack.c.bf16 %v455, %v454
        %v511 = vpack.c.bf16 %v457, %v456
        %v512 = vpack.c.bf16 %v459, %v458
        %v513 = vpack.c.bf16 %v461, %v460
        %v514 = vpack.c.bf16 %v463, %v462
        %v515 = vpack.c.bf16 %v465, %v464
        %v516 = vpack.c.bf16 %v467, %v466
        %v517 = vpack.c.bf16 %v469, %v468
        %v518 = vpack.c.bf16 %v471, %v470
        %v519 = vpack.c.bf16 %v473, %v472
        %v520 = vpack.c.bf16 %v475, %v474
        %v521 = vpack.c.bf16 %v477, %v476
        %v522 = vpack.c.bf16 %v479, %v478
        %v523 = vpack.c.bf16 %v481, %v480
        %v524 = vpack.c.bf16 %v483, %v482
        %v525 = vpack.c.bf16 %v485, %v484
        %v526 = vpack.c.bf16 %v487, %v486
        %v527 = vpack.c.bf16 %v489, %v488
        %v528 = vpack.c.bf16 %v491, %v490
        %v529 = vpack.c.bf16 %v493, %v492
        %v530 = vpack.c.bf16 %v495, %v494
        %v531 = vpack.c.bf16 %v497, %v496
        %v532 = vpack.c.bf16 %v499, %v498
        %v533 = vpack.c.bf16 %v501, %v500
        %v534 = vld [vmem:[#allocation8] sm:$0xf]
        %v535 = vld [vmem:[#allocation8 + $0x4] sm:$0xf]
        %v536 = vld [vmem:[#allocation8 + $0x8] sm:$0xf]
        %v537 = vld [vmem:[#allocation8 + $0xc] sm:$0xf]
        %v538 = vld [vmem:[#allocation8 + $0x10] sm:$0xf]
        %v539 = vld [vmem:[#allocation8 + $0x14] sm:$0xf]
        %v540 = vld [vmem:[#allocation8 + $0x18] sm:$0xf]
        %v541 = vld [vmem:[#allocation8 + $0x1c] sm:$0xf]
        %v542 = vld [vmem:[#allocation8 + $0x20] sm:$0xf]
        %v543 = vld [vmem:[#allocation8 + $0x24] sm:$0xf]
        %v544 = vld [vmem:[#allocation8 + $0x28] sm:$0xf]
        %v545 = vld [vmem:[#allocation8 + $0x2c] sm:$0xf]
        %v546 = vld [vmem:[#allocation8 + $0x30] sm:$0xf]
        %v547 = vld [vmem:[#allocation8 + $0x34] sm:$0xf]
        %v548 = vld [vmem:[#allocation8 + $0x38] sm:$0xf]
        %v549 = vld [vmem:[#allocation8 + $0x3c] sm:$0xf]
        %v550 = vld [vmem:[%s3] sm:$0x1]
        %v552 = vlaneseq
        %v553 = vshrl.u32 %v552, 7
        %v554 = vsub.s32 0, %v553
        %v555 = vrot.slane %v550, %v554
        %v573 = vunpack.c.l.b16 %v534
        %v574 = vunpack.c.l.b16 %v535
        %v575 = vunpack.c.l.b16 %v536
        %v576 = vunpack.c.l.b16 %v537
        %v577 = vunpack.c.l.b16 %v538
        %v578 = vunpack.c.l.b16 %v539
        %v579 = vunpack.c.l.b16 %v540
        %v580 = vunpack.c.l.b16 %v541
        %v581 = vunpack.c.l.b16 %v542
        %v582 = vunpack.c.l.b16 %v543
        %v583 = vunpack.c.l.b16 %v544
        %v584 = vunpack.c.l.b16 %v545
        %v585 = vunpack.c.l.b16 %v546
        %v586 = vunpack.c.l.b16 %v547
        %v587 = vunpack.c.l.b16 %v548
        %v588 = vunpack.c.l.b16 %v549
        %v589 = vpack.c.b16 %v574, %v573
        %v590 = vpack.c.b16 %v576, %v575
        %v591 = vpack.c.b16 %v578, %v577
        %v592 = vpack.c.b16 %v580, %v579
        %v593 = vpack.c.b16 %v582, %v581
        %v594 = vpack.c.b16 %v584, %v583
        %v595 = vpack.c.b16 %v586, %v585
        %v596 = vpack.c.b16 %v588, %v587
        %605 = vmatprep.subr.bf16.mxu0 0
        %606 = vmatpush1.bf16.msra.mxu0 %v589
        %607 = vmatprep.subr.bf16.mxu0 0
        %608 = vmatpush1.bf16.msra.mxu0 %v590
        %609 = vmatprep.subr.bf16.mxu0 0
        %610 = vmatpush1.bf16.msra.mxu0 %v591
        %611 = vmatprep.subr.bf16.mxu0 0
        %612 = vmatpush1.bf16.msra.mxu0 %v592
        %613 = vmatprep.subr.bf16.mxu0 0
        %614 = vmatpush1.bf16.msra.mxu0 %v593
        %615 = vmatprep.subr.bf16.mxu0 0
        %616 = vmatpush1.bf16.msra.mxu0 %v594
        %617 = vmatprep.subr.bf16.mxu0 0
        %618 = vmatpush1.bf16.msra.mxu0 %v595
        %619 = vmatprep.subr.bf16.mxu0 0
        %620 = vmatpush1.bf16.msra.mxu0 %v596
        %621 = vmatprep.subr.bf16.mxu0 0
        %622 = vmatpush1.bf16.msra.mxu0 0
        %623 = vmatprep.subr.bf16.mxu0 0
        %624 = vmatpush1.bf16.msra.mxu0 0
        %625 = vmatprep.subr.bf16.mxu0 0
        %626 = vmatpush1.bf16.msra.mxu0 0
        %627 = vmatprep.subr.bf16.mxu0 0
        %628 = vmatpush1.bf16.msra.mxu0 0
        %629 = vmatprep.subr.bf16.mxu0 0
        %630 = vmatpush1.bf16.msra.mxu0 0
        %631 = vmatprep.subr.bf16.mxu0 0
        %632 = vmatpush1.bf16.msra.mxu0 0
        %633 = vmatprep.subr.bf16.mxu0 0
        %634 = vmatpush1.bf16.msra.mxu0 0
        %635 = vmatprep.subr.bf16.mxu0 0
        %636 = vmatpush1.bf16.msra.mxu0 0
        %637 = vmatprep.mubr.bf16.mxu0 0
        %638 = vmatmul.mubr.bf16.gmra.mrb[0].mxu0 %v406
        %v639 = vpop.f32.mrb[0].mxu0
        %v640 = vadd.f32 %v555, %v639
        %v641 = vpop.f32.mrb[0].mxu0
        %v642 = vpop.f32.mrb[0].mxu0
        %v643 = vadd.f32 %v555, %v642
        %v644 = vpop.f32.mrb[0].mxu0
        %645 = vmatprep.mubr.bf16.mxu0 0
        %646 = vmatmul.mubr.bf16.gmra.mrb[0].mxu0 %v407
        %v647 = vpop.f32.mrb[0].mxu0
        %v648 = vadd.f32 %v555, %v647
        %v649 = vpop.f32.mrb[0].mxu0
        %v650 = vpop.f32.mrb[0].mxu0
        %v651 = vadd.f32 %v555, %v650
        %v652 = vpop.f32.mrb[0].mxu0
        %653 = vmatprep.mubr.bf16.mxu0 0
        %654 = vmatmul.mubr.bf16.gmra.mrb[0].mxu0 %v408
        %v655 = vpop.f32.mrb[0].mxu0
        %v656 = vadd.f32 %v555, %v655
        %v657 = vpop.f32.mrb[0].mxu0
        %v658 = vpop.f32.mrb[0].mxu0
        %v659 = vadd.f32 %v555, %v658
        %v660 = vpop.f32.mrb[0].mxu0
        %661 = vmatprep.mubr.bf16.mxu0 0
        %662 = vmatmul.mubr.bf16.gmra.mrb[0].mxu0 %v409
        %v663 = vpop.f32.mrb[0].mxu0
        %v664 = vadd.f32 %v555, %v663
        %v665 = vpop.f32.mrb[0].mxu0
        %v666 = vpop.f32.mrb[0].mxu0
        %v667 = vadd.f32 %v555, %v666
        %v668 = vpop.f32.mrb[0].mxu0
        %669 = vmatprep.mubr.bf16.mxu0 0
        %670 = vmatmul.mubr.bf16.gmra.mrb[0].mxu0 %v410
        %v671 = vpop.f32.mrb[0].mxu0
        %v672 = vadd.f32 %v555, %v671
        %v673 = vpop.f32.mrb[0].mxu0
        %v674 = vpop.f32.mrb[0].mxu0
        %v675 = vadd.f32 %v555, %v674
        %v676 = vpop.f32.mrb[0].mxu0
        %677 = vmatprep.mubr.bf16.mxu0 0
        %678 = vmatmul.mubr.bf16.gmra.mrb[0].mxu0 %v411
        %v679 = vpop.f32.mrb[0].mxu0
        %v680 = vadd.f32 %v555, %v679
        %v681 = vpop.f32.mrb[0].mxu0
        %v682 = vpop.f32.mrb[0].mxu0
        %v683 = vadd.f32 %v555, %v682
        %v684 = vpop.f32.mrb[0].mxu0
        %685 = vmatprep.mubr.bf16.mxu0 0
        %686 = vmatmul.mubr.bf16.gmra.mrb[0].mxu0 %v412
        %v687 = vpop.f32.mrb[0].mxu0
        %v688 = vadd.f32 %v555, %v687
        %v689 = vpop.f32.mrb[0].mxu0
        %v690 = vpop.f32.mrb[0].mxu0
        %v691 = vadd.f32 %v555, %v690
        %v692 = vpop.f32.mrb[0].mxu0
        %693 = vmatprep.mubr.bf16.mxu0 0
        %694 = vmatmul.mubr.bf16.gmra.mrb[0].mxu0 %v413
        %v695 = vpop.f32.mrb[0].mxu0
        %v696 = vadd.f32 %v555, %v695
        %v697 = vpop.f32.mrb[0].mxu0
        %v698 = vpop.f32.mrb[0].mxu0
        %v699 = vadd.f32 %v555, %v698
        %v700 = vpop.f32.mrb[0].mxu0
        %701 = vmatprep.mubr.bf16.mxu0 0
        %702 = vmatmul.mubr.bf16.gmra.mrb[0].mxu0 %v414
        %v703 = vpop.f32.mrb[0].mxu0
        %v704 = vadd.f32 %v555, %v703
        %v705 = vpop.f32.mrb[0].mxu0
        %v706 = vpop.f32.mrb[0].mxu0
        %v707 = vadd.f32 %v555, %v706
        %v708 = vpop.f32.mrb[0].mxu0
        %709 = vmatprep.mubr.bf16.mxu0 0
        %710 = vmatmul.mubr.bf16.gmra.mrb[0].mxu0 %v415
        %v711 = vpop.f32.mrb[0].mxu0
        %v712 = vadd.f32 %v555, %v711
        %v713 = vpop.f32.mrb[0].mxu0
        %v714 = vpop.f32.mrb[0].mxu0
        %v715 = vadd.f32 %v555, %v714
        %v716 = vpop.f32.mrb[0].mxu0
        %717 = vmatprep.mubr.bf16.mxu0 0
        %718 = vmatmul.mubr.bf16.gmra.mrb[0].mxu0 %v416
        %v719 = vpop.f32.mrb[0].mxu0
        %v720 = vadd.f32 %v555, %v719
        %v721 = vpop.f32.mrb[0].mxu0
        %v722 = vpop.f32.mrb[0].mxu0
        %v723 = vadd.f32 %v555, %v722
        %v724 = vpop.f32.mrb[0].mxu0
        %725 = vmatprep.mubr.bf16.mxu0 0
        %726 = vmatmul.mubr.bf16.gmra.mrb[0].mxu0 %v417
        %v727 = vpop.f32.mrb[0].mxu0
        %v728 = vadd.f32 %v555, %v727
        %v729 = vpop.f32.mrb[0].mxu0
        %v730 = vpop.f32.mrb[0].mxu0
        %v731 = vadd.f32 %v555, %v730
        %v732 = vpop.f32.mrb[0].mxu0
        %733 = vmatprep.mubr.bf16.mxu0 0
        %734 = vmatmul.mubr.bf16.gmra.mrb[0].mxu0 %v418
        %v735 = vpop.f32.mrb[0].mxu0
        %v736 = vadd.f32 %v555, %v735
        %v737 = vpop.f32.mrb[0].mxu0
        %v738 = vpop.f32.mrb[0].mxu0
        %v739 = vadd.f32 %v555, %v738
        %v740 = vpop.f32.mrb[0].mxu0
        %741 = vmatprep.mubr.bf16.mxu0 0
        %742 = vmatmul.mubr.bf16.gmra.mrb[0].mxu0 %v419
        %v743 = vpop.f32.mrb[0].mxu0
        %v744 = vadd.f32 %v555, %v743
        %v745 = vpop.f32.mrb[0].mxu0
        %v746 = vpop.f32.mrb[0].mxu0
        %v747 = vadd.f32 %v555, %v746
        %v748 = vpop.f32.mrb[0].mxu0
        %749 = vmatprep.mubr.bf16.mxu0 0
        %750 = vmatmul.mubr.bf16.gmra.mrb[0].mxu0 %v420
        %v751 = vpop.f32.mrb[0].mxu0
        %v752 = vadd.f32 %v555, %v751
        %v753 = vpop.f32.mrb[0].mxu0
        %v754 = vpop.f32.mrb[0].mxu0
        %v755 = vadd.f32 %v555, %v754
        %v756 = vpop.f32.mrb[0].mxu0
        %757 = vmatprep.mubr.bf16.mxu0 0
        %758 = vmatmul.mubr.bf16.gmra.mrb[0].mxu0 %v421
        %v759 = vpop.f32.mrb[0].mxu0
        %v760 = vadd.f32 %v555, %v759
        %v761 = vpop.f32.mrb[0].mxu0
        %v762 = vpop.f32.mrb[0].mxu0
        %v763 = vadd.f32 %v555, %v762
        %v764 = vpop.f32.mrb[0].mxu0
        %765 = vmatprep.mubr.bf16.mxu0 0
        %766 = vmatmul.mubr.bf16.gmra.mrb[0].mxu0 %v422
        %v767 = vpop.f32.mrb[0].mxu0
        %v768 = vadd.f32 %v555, %v767
        %v769 = vpop.f32.mrb[0].mxu0
        %v770 = vpop.f32.mrb[0].mxu0
        %v771 = vadd.f32 %v555, %v770
        %v772 = vpop.f32.mrb[0].mxu0
        %773 = vmatprep.mubr.bf16.mxu0 0
        %774 = vmatmul.mubr.bf16.gmra.mrb[0].mxu0 %v423
        %v775 = vpop.f32.mrb[0].mxu0
        %v776 = vadd.f32 %v555, %v775
        %v777 = vpop.f32.mrb[0].mxu0
        %v778 = vpop.f32.mrb[0].mxu0
        %v779 = vadd.f32 %v555, %v778
        %v780 = vpop.f32.mrb[0].mxu0
        %781 = vmatprep.mubr.bf16.mxu0 0
        %782 = vmatmul.mubr.bf16.gmra.mrb[0].mxu0 %v424
        %v783 = vpop.f32.mrb[0].mxu0
        %v784 = vadd.f32 %v555, %v783
        %v785 = vpop.f32.mrb[0].mxu0
        %v786 = vpop.f32.mrb[0].mxu0
        %v787 = vadd.f32 %v555, %v786
        %v788 = vpop.f32.mrb[0].mxu0
        %789 = vmatprep.mubr.bf16.mxu0 0
        %790 = vmatmul.mubr.bf16.gmra.mrb[0].mxu0 %v425
        %v791 = vpop.f32.mrb[0].mxu0
        %v792 = vadd.f32 %v555, %v791
        %v793 = vpop.f32.mrb[0].mxu0
        %v794 = vpop.f32.mrb[0].mxu0
        %v795 = vadd.f32 %v555, %v794
        %v796 = vpop.f32.mrb[0].mxu0
        %797 = vmatprep.mubr.bf16.mxu0 0
        %798 = vmatmul.mubr.bf16.gmra.mrb[0].mxu0 %v426
        %v799 = vpop.f32.mrb[0].mxu0
        %v800 = vadd.f32 %v555, %v799
        %v801 = vpop.f32.mrb[0].mxu0
        %v802 = vpop.f32.mrb[0].mxu0
        %v803 = vadd.f32 %v555, %v802
        %v804 = vpop.f32.mrb[0].mxu0
        %805 = vmatprep.mubr.bf16.mxu0 0
        %806 = vmatmul.mubr.bf16.gmra.mrb[0].mxu0 %v427
        %v807 = vpop.f32.mrb[0].mxu0
        %v808 = vadd.f32 %v555, %v807
        %v809 = vpop.f32.mrb[0].mxu0
        %v810 = vpop.f32.mrb[0].mxu0
        %v811 = vadd.f32 %v555, %v810
        %v812 = vpop.f32.mrb[0].mxu0
        %813 = vmatprep.mubr.bf16.mxu0 0
        %814 = vmatmul.mubr.bf16.gmra.mrb[0].mxu0 %v428
        %v815 = vpop.f32.mrb[0].mxu0
        %v816 = vadd.f32 %v555, %v815
        %v817 = vpop.f32.mrb[0].mxu0
        %v818 = vpop.f32.mrb[0].mxu0
        %v819 = vadd.f32 %v555, %v818
        %v820 = vpop.f32.mrb[0].mxu0
        %821 = vmatprep.mubr.bf16.mxu0 0
        %822 = vmatmul.mubr.bf16.gmra.mrb[0].mxu0 %v429
        %v823 = vpop.f32.mrb[0].mxu0
        %v824 = vadd.f32 %v555, %v823
        %v825 = vpop.f32.mrb[0].mxu0
        %v826 = vpop.f32.mrb[0].mxu0
        %v827 = vadd.f32 %v555, %v826
        %v828 = vpop.f32.mrb[0].mxu0
        %829 = vmatprep.mubr.bf16.mxu0 0
        %830 = vmatmul.mubr.bf16.gmra.mrb[0].mxu0 %v430
        %v831 = vpop.f32.mrb[0].mxu0
        %v832 = vadd.f32 %v555, %v831
        %v833 = vpop.f32.mrb[0].mxu0
        %v834 = vpop.f32.mrb[0].mxu0
        %v835 = vadd.f32 %v555, %v834
        %v836 = vpop.f32.mrb[0].mxu0
        %837 = vmatprep.mubr.bf16.mxu0 0
        %838 = vmatmul.mubr.bf16.gmra.mrb[0].mxu0 %v431
        %v839 = vpop.f32.mrb[0].mxu0
        %v840 = vadd.f32 %v555, %v839
        %v841 = vpop.f32.mrb[0].mxu0
        %v842 = vpop.f32.mrb[0].mxu0
        %v843 = vadd.f32 %v555, %v842
        %v844 = vpop.f32.mrb[0].mxu0
        %845 = vmatprep.mubr.bf16.mxu0 0
        %846 = vmatmul.mubr.bf16.gmra.mrb[0].mxu0 %v432
        %v847 = vpop.f32.mrb[0].mxu0
        %v848 = vadd.f32 %v555, %v847
        %v849 = vpop.f32.mrb[0].mxu0
        %v850 = vpop.f32.mrb[0].mxu0
        %v851 = vadd.f32 %v555, %v850
        %v852 = vpop.f32.mrb[0].mxu0
        %853 = vmatprep.mubr.bf16.mxu0 0
        %854 = vmatmul.mubr.bf16.gmra.mrb[0].mxu0 %v433
        %v855 = vpop.f32.mrb[0].mxu0
        %v856 = vadd.f32 %v555, %v855
        %v857 = vpop.f32.mrb[0].mxu0
        %v858 = vpop.f32.mrb[0].mxu0
        %v859 = vadd.f32 %v555, %v858
        %v860 = vpop.f32.mrb[0].mxu0
        %861 = vmatprep.mubr.bf16.mxu0 0
        %862 = vmatmul.mubr.bf16.gmra.mrb[0].mxu0 %v434
        %v863 = vpop.f32.mrb[0].mxu0
        %v864 = vadd.f32 %v555, %v863
        %v865 = vpop.f32.mrb[0].mxu0
        %v866 = vpop.f32.mrb[0].mxu0
        %v867 = vadd.f32 %v555, %v866
        %v868 = vpop.f32.mrb[0].mxu0
        %869 = vmatprep.mubr.bf16.mxu0 0
        %870 = vmatmul.mubr.bf16.gmra.mrb[0].mxu0 %v435
        %v871 = vpop.f32.mrb[0].mxu0
        %v872 = vadd.f32 %v555, %v871
        %v873 = vpop.f32.mrb[0].mxu0
        %v874 = vpop.f32.mrb[0].mxu0
        %v875 = vadd.f32 %v555, %v874
        %v876 = vpop.f32.mrb[0].mxu0
        %877 = vmatprep.mubr.bf16.mxu0 0
        %878 = vmatmul.mubr.bf16.gmra.mrb[0].mxu0 %v436
        %v879 = vpop.f32.mrb[0].mxu0
        %v880 = vadd.f32 %v555, %v879
        %v881 = vpop.f32.mrb[0].mxu0
        %v882 = vpop.f32.mrb[0].mxu0
        %v883 = vadd.f32 %v555, %v882
        %v884 = vpop.f32.mrb[0].mxu0
        %885 = vmatprep.mubr.bf16.mxu0 0
        %886 = vmatmul.mubr.bf16.gmra.mrb[0].mxu0 %v437
        %v887 = vpop.f32.mrb[0].mxu0
        %v888 = vadd.f32 %v555, %v887
        %v889 = vpop.f32.mrb[0].mxu0
        %v890 = vpop.f32.mrb[0].mxu0
        %v891 = vadd.f32 %v555, %v890
        %v892 = vpop.f32.mrb[0].mxu0
        %893 = vmatprep.mubr.bf16.mxu0 0
        %894 = vmatmul.mubr.bf16.gmra.mrb[0].mxu0 %v502
        %v895 = vpop.f32.mrb[0].mxu0
        %v896 = vadd.f32 %v555, %v895
        %v897 = vpop.f32.mrb[0].mxu0
        %v898 = vpop.f32.mrb[0].mxu0
        %v899 = vadd.f32 %v555, %v898
        %v900 = vpop.f32.mrb[0].mxu0
        %901 = vmatprep.mubr.bf16.mxu0 0
        %902 = vmatmul.mubr.bf16.gmra.mrb[0].mxu0 %v503
        %v903 = vpop.f32.mrb[0].mxu0
        %v904 = vadd.f32 %v555, %v903
        %v905 = vpop.f32.mrb[0].mxu0
        %v906 = vpop.f32.mrb[0].mxu0
        %v907 = vadd.f32 %v555, %v906
        %v908 = vpop.f32.mrb[0].mxu0
        %909 = vmatprep.mubr.bf16.mxu0 0
        %910 = vmatmul.mubr.bf16.gmra.mrb[0].mxu0 %v504
        %v911 = vpop.f32.mrb[0].mxu0
        %v912 = vadd.f32 %v555, %v911
        %v913 = vpop.f32.mrb[0].mxu0
        %v914 = vpop.f32.mrb[0].mxu0
        %v915 = vadd.f32 %v555, %v914
        %v916 = vpop.f32.mrb[0].mxu0
        %917 = vmatprep.mubr.bf16.mxu0 0
        %918 = vmatmul.mubr.bf16.gmra.mrb[0].mxu0 %v505
        %v919 = vpop.f32.mrb[0].mxu0
        %v920 = vadd.f32 %v555, %v919
        %v921 = vpop.f32.mrb[0].mxu0
        %v922 = vpop.f32.mrb[0].mxu0
        %v923 = vadd.f32 %v555, %v922
        %v924 = vpop.f32.mrb[0].mxu0
        %925 = vmatprep.mubr.bf16.mxu0 0
        %926 = vmatmul.mubr.bf16.gmra.mrb[0].mxu0 %v506
        %v927 = vpop.f32.mrb[0].mxu0
        %v928 = vadd.f32 %v555, %v927
        %v929 = vpop.f32.mrb[0].mxu0
        %v930 = vpop.f32.mrb[0].mxu0
        %v931 = vadd.f32 %v555, %v930
        %v932 = vpop.f32.mrb[0].mxu0
        %933 = vmatprep.mubr.bf16.mxu0 0
        %934 = vmatmul.mubr.bf16.gmra.mrb[0].mxu0 %v507
        %v935 = vpop.f32.mrb[0].mxu0
        %v936 = vadd.f32 %v555, %v935
        %v937 = vpop.f32.mrb[0].mxu0
        %v938 = vpop.f32.mrb[0].mxu0
        %v939 = vadd.f32 %v555, %v938
        %v940 = vpop.f32.mrb[0].mxu0
        %941 = vmatprep.mubr.bf16.mxu0 0
        %942 = vmatmul.mubr.bf16.gmra.mrb[0].mxu0 %v508
        %v943 = vpop.f32.mrb[0].mxu0
        %v944 = vadd.f32 %v555, %v943
        %v945 = vpop.f32.mrb[0].mxu0
        %v946 = vpop.f32.mrb[0].mxu0
        %v947 = vadd.f32 %v555, %v946
        %v948 = vpop.f32.mrb[0].mxu0
        %949 = vmatprep.mubr.bf16.mxu0 0
        %950 = vmatmul.mubr.bf16.gmra.mrb[0].mxu0 %v509
        %v951 = vpop.f32.mrb[0].mxu0
        %v952 = vadd.f32 %v555, %v951
        %v953 = vpop.f32.mrb[0].mxu0
        %v954 = vpop.f32.mrb[0].mxu0
        %v955 = vadd.f32 %v555, %v954
        %v956 = vpop.f32.mrb[0].mxu0
        %957 = vmatprep.mubr.bf16.mxu0 0
        %958 = vmatmul.mubr.bf16.gmra.mrb[0].mxu0 %v510
        %v959 = vpop.f32.mrb[0].mxu0
        %v960 = vadd.f32 %v555, %v959
        %v961 = vpop.f32.mrb[0].mxu0
        %v962 = vpop.f32.mrb[0].mxu0
        %v963 = vadd.f32 %v555, %v962
        %v964 = vpop.f32.mrb[0].mxu0
        %965 = vmatprep.mubr.bf16.mxu0 0
        %966 = vmatmul.mubr.bf16.gmra.mrb[0].mxu0 %v511
        %v967 = vpop.f32.mrb[0].mxu0
        %v968 = vadd.f32 %v555, %v967
        %v969 = vpop.f32.mrb[0].mxu0
        %v970 = vpop.f32.mrb[0].mxu0
        %v971 = vadd.f32 %v555, %v970
        %v972 = vpop.f32.mrb[0].mxu0
        %973 = vmatprep.mubr.bf16.mxu0 0
        %974 = vmatmul.mubr.bf16.gmra.mrb[0].mxu0 %v512
        %v975 = vpop.f32.mrb[0].mxu0
        %v976 = vadd.f32 %v555, %v975
        %v977 = vpop.f32.mrb[0].mxu0
        %v978 = vpop.f32.mrb[0].mxu0
        %v979 = vadd.f32 %v555, %v978
        %v980 = vpop.f32.mrb[0].mxu0
        %981 = vmatprep.mubr.bf16.mxu0 0
        %982 = vmatmul.mubr.bf16.gmra.mrb[0].mxu0 %v513
        %v983 = vpop.f32.mrb[0].mxu0
        %v984 = vadd.f32 %v555, %v983
        %v985 = vpop.f32.mrb[0].mxu0
        %v986 = vpop.f32.mrb[0].mxu0
        %v987 = vadd.f32 %v555, %v986
        %v988 = vpop.f32.mrb[0].mxu0
        %989 = vmatprep.mubr.bf16.mxu0 0
        %990 = vmatmul.mubr.bf16.gmra.mrb[0].mxu0 %v514
        %v991 = vpop.f32.mrb[0].mxu0
        %v992 = vadd.f32 %v555, %v991
        %v993 = vpop.f32.mrb[0].mxu0
        %v994 = vpop.f32.mrb[0].mxu0
        %v995 = vadd.f32 %v555, %v994
        %v996 = vpop.f32.mrb[0].mxu0
        %997 = vmatprep.mubr.bf16.mxu0 0
        %998 = vmatmul.mubr.bf16.gmra.mrb[0].mxu0 %v515
        %v999 = vpop.f32.mrb[0].mxu0
        %v1000 = vadd.f32 %v555, %v999
        %v1001 = vpop.f32.mrb[0].mxu0
        %v1002 = vpop.f32.mrb[0].mxu0
        %v1003 = vadd.f32 %v555, %v1002
        %v1004 = vpop.f32.mrb[0].mxu0
        %1005 = vmatprep.mubr.bf16.mxu0 0
        %1006 = vmatmul.mubr.bf16.gmra.mrb[0].mxu0 %v516
        %v1007 = vpop.f32.mrb[0].mxu0
        %v1008 = vadd.f32 %v555, %v1007
        %v1009 = vpop.f32.mrb[0].mxu0
        %v1010 = vpop.f32.mrb[0].mxu0
        %v1011 = vadd.f32 %v555, %v1010
        %v1012 = vpop.f32.mrb[0].mxu0
        %1013 = vmatprep.mubr.bf16.mxu0 0
        %1014 = vmatmul.mubr.bf16.gmra.mrb[0].mxu0 %v517
        %v1015 = vpop.f32.mrb[0].mxu0
        %v1016 = vadd.f32 %v555, %v1015
        %v1017 = vpop.f32.mrb[0].mxu0
        %v1018 = vpop.f32.mrb[0].mxu0
        %v1019 = vadd.f32 %v555, %v1018
        %v1020 = vpop.f32.mrb[0].mxu0
        %1021 = vmatprep.mubr.bf16.mxu0 0
        %1022 = vmatmul.mubr.bf16.gmra.mrb[0].mxu0 %v518
        %v1023 = vpop.f32.mrb[0].mxu0
        %v1024 = vadd.f32 %v555, %v1023
        %v1025 = vpop.f32.mrb[0].mxu0
        %v1026 = vpop.f32.mrb[0].mxu0
        %v1027 = vadd.f32 %v555, %v1026
        %v1028 = vpop.f32.mrb[0].mxu0
        %1029 = vmatprep.mubr.bf16.mxu0 0
        %1030 = vmatmul.mubr.bf16.gmra.mrb[0].mxu0 %v519
        %v1031 = vpop.f32.mrb[0].mxu0
        %v1032 = vadd.f32 %v555, %v1031
        %v1033 = vpop.f32.mrb[0].mxu0
        %v1034 = vpop.f32.mrb[0].mxu0
        %v1035 = vadd.f32 %v555, %v1034
        %v1036 = vpop.f32.mrb[0].mxu0
        %1037 = vmatprep.mubr.bf16.mxu0 0
        %1038 = vmatmul.mubr.bf16.gmra.mrb[0].mxu0 %v520
        %v1039 = vpop.f32.mrb[0].mxu0
        %v1040 = vadd.f32 %v555, %v1039
        %v1041 = vpop.f32.mrb[0].mxu0
        %v1042 = vpop.f32.mrb[0].mxu0
        %v1043 = vadd.f32 %v555, %v1042
        %v1044 = vpop.f32.mrb[0].mxu0
        %1045 = vmatprep.mubr.bf16.mxu0 0
        %1046 = vmatmul.mubr.bf16.gmra.mrb[0].mxu0 %v521
        %v1047 = vpop.f32.mrb[0].mxu0
        %v1048 = vadd.f32 %v555, %v1047
        %v1049 = vpop.f32.mrb[0].mxu0
        %v1050 = vpop.f32.mrb[0].mxu0
        %v1051 = vadd.f32 %v555, %v1050
        %v1052 = vpop.f32.mrb[0].mxu0
        %1053 = vmatprep.mubr.bf16.mxu0 0
        %1054 = vmatmul.mubr.bf16.gmra.mrb[0].mxu0 %v522
        %v1055 = vpop.f32.mrb[0].mxu0
        %v1056 = vadd.f32 %v555, %v1055
        %v1057 = vpop.f32.mrb[0].mxu0
        %v1058 = vpop.f32.mrb[0].mxu0
        %v1059 = vadd.f32 %v555, %v1058
        %v1060 = vpop.f32.mrb[0].mxu0
        %1061 = vmatprep.mubr.bf16.mxu0 0
        %1062 = vmatmul.mubr.bf16.gmra.mrb[0].mxu0 %v523
        %v1063 = vpop.f32.mrb[0].mxu0
        %v1064 = vadd.f32 %v555, %v1063
        %v1065 = vpop.f32.mrb[0].mxu0
        %v1066 = vpop.f32.mrb[0].mxu0
        %v1067 = vadd.f32 %v555, %v1066
        %v1068 = vpop.f32.mrb[0].mxu0
        %1069 = vmatprep.mubr.bf16.mxu0 0
        %1070 = vmatmul.mubr.bf16.gmra.mrb[0].mxu0 %v524
        %v1071 = vpop.f32.mrb[0].mxu0
        %v1072 = vadd.f32 %v555, %v1071
        %v1073 = vpop.f32.mrb[0].mxu0
        %v1074 = vpop.f32.mrb[0].mxu0
        %v1075 = vadd.f32 %v555, %v1074
        %v1076 = vpop.f32.mrb[0].mxu0
        %1077 = vmatprep.mubr.bf16.mxu0 0
        %1078 = vmatmul.mubr.bf16.gmra.mrb[0].mxu0 %v525
        %v1079 = vpop.f32.mrb[0].mxu0
        %v1080 = vadd.f32 %v555, %v1079
        %v1081 = vpop.f32.mrb[0].mxu0
        %v1082 = vpop.f32.mrb[0].mxu0
        %v1083 = vadd.f32 %v555, %v1082
        %v1084 = vpop.f32.mrb[0].mxu0
        %1085 = vmatprep.mubr.bf16.mxu0 0
        %1086 = vmatmul.mubr.bf16.gmra.mrb[0].mxu0 %v526
        %v1087 = vpop.f32.mrb[0].mxu0
        %v1088 = vadd.f32 %v555, %v1087
        %v1089 = vpop.f32.mrb[0].mxu0
        %v1090 = vpop.f32.mrb[0].mxu0
        %v1091 = vadd.f32 %v555, %v1090
        %v1092 = vpop.f32.mrb[0].mxu0
        %1093 = vmatprep.mubr.bf16.mxu0 0
        %1094 = vmatmul.mubr.bf16.gmra.mrb[0].mxu0 %v527
        %v1095 = vpop.f32.mrb[0].mxu0
        %v1096 = vadd.f32 %v555, %v1095
        %v1097 = vpop.f32.mrb[0].mxu0
        %v1098 = vpop.f32.mrb[0].mxu0
        %v1099 = vadd.f32 %v555, %v1098
        %v1100 = vpop.f32.mrb[0].mxu0
        %1101 = vmatprep.mubr.bf16.mxu0 0
        %1102 = vmatmul.mubr.bf16.gmra.mrb[0].mxu0 %v528
        %v1103 = vpop.f32.mrb[0].mxu0
        %v1104 = vadd.f32 %v555, %v1103
        %v1105 = vpop.f32.mrb[0].mxu0
        %v1106 = vpop.f32.mrb[0].mxu0
        %v1107 = vadd.f32 %v555, %v1106
        %v1108 = vpop.f32.mrb[0].mxu0
        %1109 = vmatprep.mubr.bf16.mxu0 0
        %1110 = vmatmul.mubr.bf16.gmra.mrb[0].mxu0 %v529
        %v1111 = vpop.f32.mrb[0].mxu0
        %v1112 = vadd.f32 %v555, %v1111
        %v1113 = vpop.f32.mrb[0].mxu0
        %v1114 = vpop.f32.mrb[0].mxu0
        %v1115 = vadd.f32 %v555, %v1114
        %v1116 = vpop.f32.mrb[0].mxu0
        %1117 = vmatprep.mubr.bf16.mxu0 0
        %1118 = vmatmul.mubr.bf16.gmra.mrb[0].mxu0 %v530
        %v1119 = vpop.f32.mrb[0].mxu0
        %v1120 = vadd.f32 %v555, %v1119
        %v1121 = vpop.f32.mrb[0].mxu0
        %v1122 = vpop.f32.mrb[0].mxu0
        %v1123 = vadd.f32 %v555, %v1122
        %v1124 = vpop.f32.mrb[0].mxu0
        %1125 = vmatprep.mubr.bf16.mxu0 0
        %1126 = vmatmul.mubr.bf16.gmra.mrb[0].mxu0 %v531
        %v1127 = vpop.f32.mrb[0].mxu0
        %v1128 = vadd.f32 %v555, %v1127
        %v1129 = vpop.f32.mrb[0].mxu0
        %v1130 = vpop.f32.mrb[0].mxu0
        %v1131 = vadd.f32 %v555, %v1130
        %v1132 = vpop.f32.mrb[0].mxu0
        %1133 = vmatprep.mubr.bf16.mxu0 0
        %1134 = vmatmul.mubr.bf16.gmra.mrb[0].mxu0 %v532
        %v1135 = vpop.f32.mrb[0].mxu0
        %v1136 = vadd.f32 %v555, %v1135
        %v1137 = vpop.f32.mrb[0].mxu0
        %v1138 = vpop.f32.mrb[0].mxu0
        %v1139 = vadd.f32 %v555, %v1138
        %v1140 = vpop.f32.mrb[0].mxu0
        %1141 = vmatprep.mubr.bf16.mxu0 0
        %1142 = vmatmul.mubr.bf16.gmra.mrb[0].mxu0 %v533
        %v1143 = vpop.f32.mrb[0].mxu0
        %v1144 = vadd.f32 %v555, %v1143
        %v1145 = vpop.f32.mrb[0].mxu0
        %v1146 = vpop.f32.mrb[0].mxu0
        %v1147 = vadd.f32 %v555, %v1146
        %v1148 = vpop.f32.mrb[0].mxu0
        %1149 = vdwg.mxu0
        %v1150 = vmax.f32 %v640, 0.0
        %v1151 = vmax.f32 %v643, 0.0
        %v1152 = vmax.f32 %v648, 0.0
        %v1153 = vmax.f32 %v651, 0.0
        %v1154 = vmax.f32 %v656, 0.0
        %v1155 = vmax.f32 %v659, 0.0
        %v1156 = vmax.f32 %v664, 0.0
        %v1157 = vmax.f32 %v667, 0.0
        %v1158 = vmax.f32 %v672, 0.0
        %v1159 = vmax.f32 %v675, 0.0
        %v1160 = vmax.f32 %v680, 0.0
        %v1161 = vmax.f32 %v683, 0.0
        %v1162 = vmax.f32 %v688, 0.0
        %v1163 = vmax.f32 %v691, 0.0
        %v1164 = vmax.f32 %v696, 0.0
        %v1165 = vmax.f32 %v699, 0.0
        %v1166 = vmax.f32 %v704, 0.0
        %v1167 = vmax.f32 %v707, 0.0
        %v1168 = vmax.f32 %v712, 0.0
        %v1169 = vmax.f32 %v715, 0.0
        %v1170 = vmax.f32 %v720, 0.0
        %v1171 = vmax.f32 %v723, 0.0
        %v1172 = vmax.f32 %v728, 0.0
        %v1173 = vmax.f32 %v731, 0.0
        %v1174 = vmax.f32 %v736, 0.0
        %v1175 = vmax.f32 %v739, 0.0
        %v1176 = vmax.f32 %v744, 0.0
        %v1177 = vmax.f32 %v747, 0.0
        %v1178 = vmax.f32 %v752, 0.0
        %v1179 = vmax.f32 %v755, 0.0
        %v1180 = vmax.f32 %v760, 0.0
        %v1181 = vmax.f32 %v763, 0.0
        %v1182 = vmax.f32 %v768, 0.0
        %v1183 = vmax.f32 %v771, 0.0
        %v1184 = vmax.f32 %v776, 0.0
        %v1185 = vmax.f32 %v779, 0.0
        %v1186 = vmax.f32 %v784, 0.0
        %v1187 = vmax.f32 %v787, 0.0
        %v1188 = vmax.f32 %v792, 0.0
        %v1189 = vmax.f32 %v795, 0.0
        %v1190 = vmax.f32 %v800, 0.0
        %v1191 = vmax.f32 %v803, 0.0
        %v1192 = vmax.f32 %v808, 0.0
        %v1193 = vmax.f32 %v811, 0.0
        %v1194 = vmax.f32 %v816, 0.0
        %v1195 = vmax.f32 %v819, 0.0
        %v1196 = vmax.f32 %v824, 0.0
        %v1197 = vmax.f32 %v827, 0.0
        %v1198 = vmax.f32 %v832, 0.0
        %v1199 = vmax.f32 %v835, 0.0
        %v1200 = vmax.f32 %v840, 0.0
        %v1201 = vmax.f32 %v843, 0.0
        %v1202 = vmax.f32 %v848, 0.0
        %v1203 = vmax.f32 %v851, 0.0
        %v1204 = vmax.f32 %v856, 0.0
        %v1205 = vmax.f32 %v859, 0.0
        %v1206 = vmax.f32 %v864, 0.0
        %v1207 = vmax.f32 %v867, 0.0
        %v1208 = vmax.f32 %v872, 0.0
        %v1209 = vmax.f32 %v875, 0.0
        %v1210 = vmax.f32 %v880, 0.0
        %v1211 = vmax.f32 %v883, 0.0
        %v1212 = vmax.f32 %v888, 0.0
        %v1213 = vmax.f32 %v891, 0.0
        %v1214 = vmax.f32 %v896, 0.0
        %v1215 = vmax.f32 %v899, 0.0
        %v1216 = vmax.f32 %v904, 0.0
        %v1217 = vmax.f32 %v907, 0.0
        %v1218 = vmax.f32 %v912, 0.0
        %v1219 = vmax.f32 %v915, 0.0
        %v1220 = vmax.f32 %v920, 0.0
        %v1221 = vmax.f32 %v923, 0.0
        %v1222 = vmax.f32 %v928, 0.0
        %v1223 = vmax.f32 %v931, 0.0
        %v1224 = vmax.f32 %v936, 0.0
        %v1225 = vmax.f32 %v939, 0.0
        %v1226 = vmax.f32 %v944, 0.0
        %v1227 = vmax.f32 %v947, 0.0
        %v1228 = vmax.f32 %v952, 0.0
        %v1229 = vmax.f32 %v955, 0.0
        %v1230 = vmax.f32 %v960, 0.0
        %v1231 = vmax.f32 %v963, 0.0
        %v1232 = vmax.f32 %v968, 0.0
        %v1233 = vmax.f32 %v971, 0.0
        %v1234 = vmax.f32 %v976, 0.0
        %v1235 = vmax.f32 %v979, 0.0
        %v1236 = vmax.f32 %v984, 0.0
        %v1237 = vmax.f32 %v987, 0.0
        %v1238 = vmax.f32 %v992, 0.0
        %v1239 = vmax.f32 %v995, 0.0
        %v1240 = vmax.f32 %v1000, 0.0
        %v1241 = vmax.f32 %v1003, 0.0
        %v1242 = vmax.f32 %v1008, 0.0
        %v1243 = vmax.f32 %v1011, 0.0
        %v1244 = vmax.f32 %v1016, 0.0
        %v1245 = vmax.f32 %v1019, 0.0
        %v1246 = vmax.f32 %v1024, 0.0
        %v1247 = vmax.f32 %v1027, 0.0
        %v1248 = vmax.f32 %v1032, 0.0
        %v1249 = vmax.f32 %v1035, 0.0
        %v1250 = vmax.f32 %v1040, 0.0
        %v1251 = vmax.f32 %v1043, 0.0
        %v1252 = vmax.f32 %v1048, 0.0
        %v1253 = vmax.f32 %v1051, 0.0
        %v1254 = vmax.f32 %v1056, 0.0
        %v1255 = vmax.f32 %v1059, 0.0
        %v1256 = vmax.f32 %v1064, 0.0
        %v1257 = vmax.f32 %v1067, 0.0
        %v1258 = vmax.f32 %v1072, 0.0
        %v1259 = vmax.f32 %v1075, 0.0
        %v1260 = vmax.f32 %v1080, 0.0
        %v1261 = vmax.f32 %v1083, 0.0
        %v1262 = vmax.f32 %v1088, 0.0
        %v1263 = vmax.f32 %v1091, 0.0
        %v1264 = vmax.f32 %v1096, 0.0
        %v1265 = vmax.f32 %v1099, 0.0
        %v1266 = vmax.f32 %v1104, 0.0
        %v1267 = vmax.f32 %v1107, 0.0
        %v1268 = vmax.f32 %v1112, 0.0
        %v1269 = vmax.f32 %v1115, 0.0
        %v1270 = vmax.f32 %v1120, 0.0
        %v1271 = vmax.f32 %v1123, 0.0
        %v1272 = vmax.f32 %v1128, 0.0
        %v1273 = vmax.f32 %v1131, 0.0
        %v1274 = vmax.f32 %v1136, 0.0
        %v1275 = vmax.f32 %v1139, 0.0
        %v1276 = vmax.f32 %v1144, 0.0
        %v1277 = vmax.f32 %v1147, 0.0
        %v1278 = vpack.c.bf16 %v1151, %v1150
        %v1279 = vpack.c.bf16 %v1153, %v1152
        %v1280 = vpack.c.bf16 %v1155, %v1154
        %v1281 = vpack.c.bf16 %v1157, %v1156
        %v1282 = vpack.c.bf16 %v1159, %v1158
        %v1283 = vpack.c.bf16 %v1161, %v1160
        %v1284 = vpack.c.bf16 %v1163, %v1162
        %v1285 = vpack.c.bf16 %v1165, %v1164
        %v1286 = vpack.c.bf16 %v1167, %v1166
        %v1287 = vpack.c.bf16 %v1169, %v1168
        %v1288 = vpack.c.bf16 %v1171, %v1170
        %v1289 = vpack.c.bf16 %v1173, %v1172
        %v1290 = vpack.c.bf16 %v1175, %v1174
        %v1291 = vpack.c.bf16 %v1177, %v1176
        %v1292 = vpack.c.bf16 %v1179, %v1178
        %v1293 = vpack.c.bf16 %v1181, %v1180
        %v1294 = vpack.c.bf16 %v1183, %v1182
        %v1295 = vpack.c.bf16 %v1185, %v1184
        %v1296 = vpack.c.bf16 %v1187, %v1186
        %v1297 = vpack.c.bf16 %v1189, %v1188
        %v1298 = vpack.c.bf16 %v1191, %v1190
        %v1299 = vpack.c.bf16 %v1193, %v1192
        %v1300 = vpack.c.bf16 %v1195, %v1194
        %v1301 = vpack.c.bf16 %v1197, %v1196
        %v1302 = vpack.c.bf16 %v1199, %v1198
        %v1303 = vpack.c.bf16 %v1201, %v1200
        %v1304 = vpack.c.bf16 %v1203, %v1202
        %v1305 = vpack.c.bf16 %v1205, %v1204
        %v1306 = vpack.c.bf16 %v1207, %v1206
        %v1307 = vpack.c.bf16 %v1209, %v1208
        %v1308 = vpack.c.bf16 %v1211, %v1210
        %v1309 = vpack.c.bf16 %v1213, %v1212
        %v1342 = vunpack.c.l.b16 %v1278
        %v1343 = vunpack.c.h.b16 %v1278
        %v1344 = vunpack.c.l.b16 %v1279
        %v1345 = vunpack.c.h.b16 %v1279
        %v1346 = vunpack.c.l.b16 %v1280
        %v1347 = vunpack.c.h.b16 %v1280
        %v1348 = vunpack.c.l.b16 %v1281
        %v1349 = vunpack.c.h.b16 %v1281
        %v1350 = vunpack.c.l.b16 %v1282
        %v1351 = vunpack.c.h.b16 %v1282
        %v1352 = vunpack.c.l.b16 %v1283
        %v1353 = vunpack.c.h.b16 %v1283
        %v1354 = vunpack.c.l.b16 %v1284
        %v1355 = vunpack.c.h.b16 %v1284
        %v1356 = vunpack.c.l.b16 %v1285
        %v1357 = vunpack.c.h.b16 %v1285
        %v1358 = vunpack.c.l.b16 %v1286
        %v1359 = vunpack.c.h.b16 %v1286
        %v1360 = vunpack.c.l.b16 %v1287
        %v1361 = vunpack.c.h.b16 %v1287
        %v1362 = vunpack.c.l.b16 %v1288
        %v1363 = vunpack.c.h.b16 %v1288
        %v1364 = vunpack.c.l.b16 %v1289
        %v1365 = vunpack.c.h.b16 %v1289
        %v1366 = vunpack.c.l.b16 %v1290
        %v1367 = vunpack.c.h.b16 %v1290
        %v1368 = vunpack.c.l.b16 %v1291
        %v1369 = vunpack.c.h.b16 %v1291
        %v1370 = vunpack.c.l.b16 %v1292
        %v1371 = vunpack.c.h.b16 %v1292
        %v1372 = vunpack.c.l.b16 %v1293
        %v1373 = vunpack.c.h.b16 %v1293
        %v1374 = vunpack.c.l.b16 %v1294
        %v1375 = vunpack.c.h.b16 %v1294
        %v1376 = vunpack.c.l.b16 %v1295
        %v1377 = vunpack.c.h.b16 %v1295
        %v1378 = vunpack.c.l.b16 %v1296
        %v1379 = vunpack.c.h.b16 %v1296
        %v1380 = vunpack.c.l.b16 %v1297
        %v1381 = vunpack.c.h.b16 %v1297
        %v1382 = vunpack.c.l.b16 %v1298
        %v1383 = vunpack.c.h.b16 %v1298
        %v1384 = vunpack.c.l.b16 %v1299
        %v1385 = vunpack.c.h.b16 %v1299
        %v1386 = vunpack.c.l.b16 %v1300
        %v1387 = vunpack.c.h.b16 %v1300
        %v1388 = vunpack.c.l.b16 %v1301
        %v1389 = vunpack.c.h.b16 %v1301
        %v1390 = vunpack.c.l.b16 %v1302
        %v1391 = vunpack.c.h.b16 %v1302
        %v1392 = vunpack.c.l.b16 %v1303
        %v1393 = vunpack.c.h.b16 %v1303
        %v1394 = vunpack.c.l.b16 %v1304
        %v1395 = vunpack.c.h.b16 %v1304
        %v1396 = vunpack.c.l.b16 %v1305
        %v1397 = vunpack.c.h.b16 %v1305
        %v1398 = vunpack.c.l.b16 %v1306
        %v1399 = vunpack.c.h.b16 %v1306
        %v1400 = vunpack.c.l.b16 %v1307
        %v1401 = vunpack.c.h.b16 %v1307
        %v1402 = vunpack.c.l.b16 %v1308
        %v1403 = vunpack.c.h.b16 %v1308
        %v1404 = vunpack.c.l.b16 %v1309
        %v1405 = vunpack.c.h.b16 %v1309
        %v1406 = vpack.c.b16 %v1342, %v1342
        %v1407 = vpack.c.b16 %v1343, %v1343
        %v1408 = vpack.c.b16 %v1344, %v1344
        %v1409 = vpack.c.b16 %v1345, %v1345
        %v1410 = vpack.c.b16 %v1346, %v1346
        %v1411 = vpack.c.b16 %v1347, %v1347
        %v1412 = vpack.c.b16 %v1348, %v1348
        %v1413 = vpack.c.b16 %v1349, %v1349
        %v1414 = vpack.c.b16 %v1350, %v1350
        %v1415 = vpack.c.b16 %v1351, %v1351
        %v1416 = vpack.c.b16 %v1352, %v1352
        %v1417 = vpack.c.b16 %v1353, %v1353
        %v1418 = vpack.c.b16 %v1354, %v1354
        %v1419 = vpack.c.b16 %v1355, %v1355
        %v1420 = vpack.c.b16 %v1356, %v1356
        %v1421 = vpack.c.b16 %v1357, %v1357
        %v1422 = vpack.c.b16 %v1358, %v1358
        %v1423 = vpack.c.b16 %v1359, %v1359
        %v1424 = vpack.c.b16 %v1360, %v1360
        %v1425 = vpack.c.b16 %v1361, %v1361
        %v1426 = vpack.c.b16 %v1362, %v1362
        %v1427 = vpack.c.b16 %v1363, %v1363
        %v1428 = vpack.c.b16 %v1364, %v1364
        %v1429 = vpack.c.b16 %v1365, %v1365
        %v1430 = vpack.c.b16 %v1366, %v1366
        %v1431 = vpack.c.b16 %v1367, %v1367
        %v1432 = vpack.c.b16 %v1368, %v1368
        %v1433 = vpack.c.b16 %v1369, %v1369
        %v1434 = vpack.c.b16 %v1370, %v1370
        %v1435 = vpack.c.b16 %v1371, %v1371
        %v1436 = vpack.c.b16 %v1372, %v1372
        %v1437 = vpack.c.b16 %v1373, %v1373
        %v1438 = vpack.c.b16 %v1374, %v1374
        %v1439 = vpack.c.b16 %v1375, %v1375
        %v1440 = vpack.c.b16 %v1376, %v1376
        %v1441 = vpack.c.b16 %v1377, %v1377
        %v1442 = vpack.c.b16 %v1378, %v1378
        %v1443 = vpack.c.b16 %v1379, %v1379
        %v1444 = vpack.c.b16 %v1380, %v1380
        %v1445 = vpack.c.b16 %v1381, %v1381
        %v1446 = vpack.c.b16 %v1382, %v1382
        %v1447 = vpack.c.b16 %v1383, %v1383
        %v1448 = vpack.c.b16 %v1384, %v1384
        %v1449 = vpack.c.b16 %v1385, %v1385
        %v1450 = vpack.c.b16 %v1386, %v1386
        %v1451 = vpack.c.b16 %v1387, %v1387
        %v1452 = vpack.c.b16 %v1388, %v1388
        %v1453 = vpack.c.b16 %v1389, %v1389
        %v1454 = vpack.c.b16 %v1390, %v1390
        %v1455 = vpack.c.b16 %v1391, %v1391
        %v1456 = vpack.c.b16 %v1392, %v1392
        %v1457 = vpack.c.b16 %v1393, %v1393
        %v1458 = vpack.c.b16 %v1394, %v1394
        %v1459 = vpack.c.b16 %v1395, %v1395
        %v1460 = vpack.c.b16 %v1396, %v1396
        %v1461 = vpack.c.b16 %v1397, %v1397
        %v1462 = vpack.c.b16 %v1398, %v1398
        %v1463 = vpack.c.b16 %v1399, %v1399
        %v1464 = vpack.c.b16 %v1400, %v1400
        %v1465 = vpack.c.b16 %v1401, %v1401
        %v1466 = vpack.c.b16 %v1402, %v1402
        %v1467 = vpack.c.b16 %v1403, %v1403
        %v1468 = vpack.c.b16 %v1404, %v1404
        %v1469 = vpack.c.b16 %v1405, %v1405
        %1534 = vst [vmem:[%s322] sm:$0xf] %v1406
        %1535 = vst [vmem:[%s322 + $0x4] sm:$0xf] %v1407
        %1536 = vst [vmem:[%s322 + $0x8] sm:$0xf] %v1408
        %1537 = vst [vmem:[%s322 + $0xc] sm:$0xf] %v1409
        %1538 = vst [vmem:[%s322 + $0x10] sm:$0xf] %v1410
        %1539 = vst [vmem:[%s322 + $0x14] sm:$0xf] %v1411
        %1540 = vst [vmem:[%s322 + $0x18] sm:$0xf] %v1412
        %1541 = vst [vmem:[%s322 + $0x1c] sm:$0xf] %v1413
        %1542 = vst [vmem:[%s322 + $0x20] sm:$0xf] %v1414
        %1543 = vst [vmem:[%s322 + $0x24] sm:$0xf] %v1415
        %1544 = vst [vmem:[%s322 + $0x28] sm:$0xf] %v1416
        %1545 = vst [vmem:[%s322 + $0x2c] sm:$0xf] %v1417
        %1546 = vst [vmem:[%s322 + $0x30] sm:$0xf] %v1418
        %1547 = vst [vmem:[%s322 + $0x34] sm:$0xf] %v1419
        %1548 = vst [vmem:[%s322 + $0x38] sm:$0xf] %v1420
        %1549 = vst [vmem:[%s322 + $0x3c] sm:$0xf] %v1421
        %1550 = vst [vmem:[%s322 + $0x40] sm:$0xf] %v1422
        %1551 = vst [vmem:[%s322 + $0x44] sm:$0xf] %v1423
        %1552 = vst [vmem:[%s322 + $0x48] sm:$0xf] %v1424
        %1553 = vst [vmem:[%s322 + $0x4c] sm:$0xf] %v1425
        %1554 = vst [vmem:[%s322 + $0x50] sm:$0xf] %v1426
        %1555 = vst [vmem:[%s322 + $0x54] sm:$0xf] %v1427
        %1556 = vst [vmem:[%s322 + $0x58] sm:$0xf] %v1428
        %1557 = vst [vmem:[%s322 + $0x5c] sm:$0xf] %v1429
        %1558 = vst [vmem:[%s322 + $0x60] sm:$0xf] %v1430
        %1559 = vst [vmem:[%s322 + $0x64] sm:$0xf] %v1431
        %1560 = vst [vmem:[%s322 + $0x68] sm:$0xf] %v1432
        %1561 = vst [vmem:[%s322 + $0x6c] sm:$0xf] %v1433
        %1562 = vst [vmem:[%s322 + $0x70] sm:$0xf] %v1434
        %1563 = vst [vmem:[%s322 + $0x74] sm:$0xf] %v1435
        %1564 = vst [vmem:[%s322 + $0x78] sm:$0xf] %v1436
        %1565 = vst [vmem:[%s322 + $0x7c] sm:$0xf] %v1437
        %1566 = vst [vmem:[%s322 + $0x80] sm:$0xf] %v1438
        %1567 = vst [vmem:[%s322 + $0x84] sm:$0xf] %v1439
        %1568 = vst [vmem:[%s322 + $0x88] sm:$0xf] %v1440
        %1569 = vst [vmem:[%s322 + $0x8c] sm:$0xf] %v1441
        %1570 = vst [vmem:[%s322 + $0x90] sm:$0xf] %v1442
        %1571 = vst [vmem:[%s322 + $0x94] sm:$0xf] %v1443
        %1572 = vst [vmem:[%s322 + $0x98] sm:$0xf] %v1444
        %1573 = vst [vmem:[%s322 + $0x9c] sm:$0xf] %v1445
        %1574 = vst [vmem:[%s322 + $0xa0] sm:$0xf] %v1446
        %1575 = vst [vmem:[%s322 + $0xa4] sm:$0xf] %v1447
        %1576 = vst [vmem:[%s322 + $0xa8] sm:$0xf] %v1448
        %1577 = vst [vmem:[%s322 + $0xac] sm:$0xf] %v1449
        %1578 = vst [vmem:[%s322 + $0xb0] sm:$0xf] %v1450
        %1579 = vst [vmem:[%s322 + $0xb4] sm:$0xf] %v1451
        %1580 = vst [vmem:[%s322 + $0xb8] sm:$0xf] %v1452
        %1581 = vst [vmem:[%s322 + $0xbc] sm:$0xf] %v1453
        %1582 = vst [vmem:[%s322 + $0xc0] sm:$0xf] %v1454
        %1583 = vst [vmem:[%s322 + $0xc4] sm:$0xf] %v1455
        %1584 = vst [vmem:[%s322 + $0xc8] sm:$0xf] %v1456
        %1585 = vst [vmem:[%s322 + $0xcc] sm:$0xf] %v1457
        %1586 = vst [vmem:[%s322 + $0xd0] sm:$0xf] %v1458
        %1587 = vst [vmem:[%s322 + $0xd4] sm:$0xf] %v1459
        %1588 = vst [vmem:[%s322 + $0xd8] sm:$0xf] %v1460
        %1589 = vst [vmem:[%s322 + $0xdc] sm:$0xf] %v1461
        %1590 = vst [vmem:[%s322 + $0xe0] sm:$0xf] %v1462
        %1591 = vst [vmem:[%s322 + $0xe4] sm:$0xf] %v1463
        %1592 = vst [vmem:[%s322 + $0xe8] sm:$0xf] %v1464
        %1593 = vst [vmem:[%s322 + $0xec] sm:$0xf] %v1465
        %1594 = vst [vmem:[%s322 + $0xf0] sm:$0xf] %v1466
        %1595 = vst [vmem:[%s322 + $0xf4] sm:$0xf] %v1467
        %1596 = vst [vmem:[%s322 + $0xf8] sm:$0xf] %v1468
        %1597 = vst [vmem:[%s322 + $0xfc] sm:$0xf] %v1469
        %v1598 = vpack.c.bf16 %v1215, %v1214
        %v1599 = vpack.c.bf16 %v1217, %v1216
        %v1600 = vpack.c.bf16 %v1219, %v1218
        %v1601 = vpack.c.bf16 %v1221, %v1220
        %v1602 = vpack.c.bf16 %v1223, %v1222
        %v1603 = vpack.c.bf16 %v1225, %v1224
        %v1604 = vpack.c.bf16 %v1227, %v1226
        %v1605 = vpack.c.bf16 %v1229, %v1228
        %v1606 = vpack.c.bf16 %v1231, %v1230
        %v1607 = vpack.c.bf16 %v1233, %v1232
        %v1608 = vpack.c.bf16 %v1235, %v1234
        %v1609 = vpack.c.bf16 %v1237, %v1236
        %v1610 = vpack.c.bf16 %v1239, %v1238
        %v1611 = vpack.c.bf16 %v1241, %v1240
        %v1612 = vpack.c.bf16 %v1243, %v1242
        %v1613 = vpack.c.bf16 %v1245, %v1244
        %v1614 = vpack.c.bf16 %v1247, %v1246
        %v1615 = vpack.c.bf16 %v1249, %v1248
        %v1616 = vpack.c.bf16 %v1251, %v1250
        %v1617 = vpack.c.bf16 %v1253, %v1252
        %v1618 = vpack.c.bf16 %v1255, %v1254
        %v1619 = vpack.c.bf16 %v1257, %v1256
        %v1620 = vpack.c.bf16 %v1259, %v1258
        %v1621 = vpack.c.bf16 %v1261, %v1260
        %v1622 = vpack.c.bf16 %v1263, %v1262
        %v1623 = vpack.c.bf16 %v1265, %v1264
        %v1624 = vpack.c.bf16 %v1267, %v1266
        %v1625 = vpack.c.bf16 %v1269, %v1268
        %v1626 = vpack.c.bf16 %v1271, %v1270
        %v1627 = vpack.c.bf16 %v1273, %v1272
        %v1628 = vpack.c.bf16 %v1275, %v1274
        %v1629 = vpack.c.bf16 %v1277, %v1276
        %v1662 = vunpack.c.l.b16 %v1598
        %v1663 = vunpack.c.h.b16 %v1598
        %v1664 = vunpack.c.l.b16 %v1599
        %v1665 = vunpack.c.h.b16 %v1599
        %v1666 = vunpack.c.l.b16 %v1600
        %v1667 = vunpack.c.h.b16 %v1600
        %v1668 = vunpack.c.l.b16 %v1601
        %v1669 = vunpack.c.h.b16 %v1601
        %v1670 = vunpack.c.l.b16 %v1602
        %v1671 = vunpack.c.h.b16 %v1602
        %v1672 = vunpack.c.l.b16 %v1603
        %v1673 = vunpack.c.h.b16 %v1603
        %v1674 = vunpack.c.l.b16 %v1604
        %v1675 = vunpack.c.h.b16 %v1604
        %v1676 = vunpack.c.l.b16 %v1605
        %v1677 = vunpack.c.h.b16 %v1605
        %v1678 = vunpack.c.l.b16 %v1606
        %v1679 = vunpack.c.h.b16 %v1606
        %v1680 = vunpack.c.l.b16 %v1607
        %v1681 = vunpack.c.h.b16 %v1607
        %v1682 = vunpack.c.l.b16 %v1608
        %v1683 = vunpack.c.h.b16 %v1608
        %v1684 = vunpack.c.l.b16 %v1609
        %v1685 = vunpack.c.h.b16 %v1609
        %v1686 = vunpack.c.l.b16 %v1610
        %v1687 = vunpack.c.h.b16 %v1610
        %v1688 = vunpack.c.l.b16 %v1611
        %v1689 = vunpack.c.h.b16 %v1611
        %v1690 = vunpack.c.l.b16 %v1612
        %v1691 = vunpack.c.h.b16 %v1612
        %v1692 = vunpack.c.l.b16 %v1613
        %v1693 = vunpack.c.h.b16 %v1613
        %v1694 = vunpack.c.l.b16 %v1614
        %v1695 = vunpack.c.h.b16 %v1614
        %v1696 = vunpack.c.l.b16 %v1615
        %v1697 = vunpack.c.h.b16 %v1615
        %v1698 = vunpack.c.l.b16 %v1616
        %v1699 = vunpack.c.h.b16 %v1616
        %v1700 = vunpack.c.l.b16 %v1617
        %v1701 = vunpack.c.h.b16 %v1617
        %v1702 = vunpack.c.l.b16 %v1618
        %v1703 = vunpack.c.h.b16 %v1618
        %v1704 = vunpack.c.l.b16 %v1619
        %v1705 = vunpack.c.h.b16 %v1619
        %v1706 = vunpack.c.l.b16 %v1620
        %v1707 = vunpack.c.h.b16 %v1620
        %v1708 = vunpack.c.l.b16 %v1621
        %v1709 = vunpack.c.h.b16 %v1621
        %v1710 = vunpack.c.l.b16 %v1622
        %v1711 = vunpack.c.h.b16 %v1622
        %v1712 = vunpack.c.l.b16 %v1623
        %v1713 = vunpack.c.h.b16 %v1623
        %v1714 = vunpack.c.l.b16 %v1624
        %v1715 = vunpack.c.h.b16 %v1624
        %v1716 = vunpack.c.l.b16 %v1625
        %v1717 = vunpack.c.h.b16 %v1625
        %v1718 = vunpack.c.l.b16 %v1626
        %v1719 = vunpack.c.h.b16 %v1626
        %v1720 = vunpack.c.l.b16 %v1627
        %v1721 = vunpack.c.h.b16 %v1627
        %v1722 = vunpack.c.l.b16 %v1628
        %v1723 = vunpack.c.h.b16 %v1628
        %v1724 = vunpack.c.l.b16 %v1629
        %v1725 = vunpack.c.h.b16 %v1629
        %v1726 = vpack.c.b16 %v1662, %v1662
        %v1727 = vpack.c.b16 %v1663, %v1663
        %v1728 = vpack.c.b16 %v1664, %v1664
        %v1729 = vpack.c.b16 %v1665, %v1665
        %v1730 = vpack.c.b16 %v1666, %v1666
        %v1731 = vpack.c.b16 %v1667, %v1667
        %v1732 = vpack.c.b16 %v1668, %v1668
        %v1733 = vpack.c.b16 %v1669, %v1669
        %v1734 = vpack.c.b16 %v1670, %v1670
        %v1735 = vpack.c.b16 %v1671, %v1671
        %v1736 = vpack.c.b16 %v1672, %v1672
        %v1737 = vpack.c.b16 %v1673, %v1673
        %v1738 = vpack.c.b16 %v1674, %v1674
        %v1739 = vpack.c.b16 %v1675, %v1675
        %v1740 = vpack.c.b16 %v1676, %v1676
        %v1741 = vpack.c.b16 %v1677, %v1677
        %v1742 = vpack.c.b16 %v1678, %v1678
        %v1743 = vpack.c.b16 %v1679, %v1679
        %v1744 = vpack.c.b16 %v1680, %v1680
        %v1745 = vpack.c.b16 %v1681, %v1681
        %v1746 = vpack.c.b16 %v1682, %v1682
        %v1747 = vpack.c.b16 %v1683, %v1683
        %v1748 = vpack.c.b16 %v1684, %v1684
        %v1749 = vpack.c.b16 %v1685, %v1685
        %v1750 = vpack.c.b16 %v1686, %v1686
        %v1751 = vpack.c.b16 %v1687, %v1687
        %v1752 = vpack.c.b16 %v1688, %v1688
        %v1753 = vpack.c.b16 %v1689, %v1689
        %v1754 = vpack.c.b16 %v1690, %v1690
        %v1755 = vpack.c.b16 %v1691, %v1691
        %v1756 = vpack.c.b16 %v1692, %v1692
        %v1757 = vpack.c.b16 %v1693, %v1693
        %v1758 = vpack.c.b16 %v1694, %v1694
        %v1759 = vpack.c.b16 %v1695, %v1695
        %v1760 = vpack.c.b16 %v1696, %v1696
        %v1761 = vpack.c.b16 %v1697, %v1697
        %v1762 = vpack.c.b16 %v1698, %v1698
        %v1763 = vpack.c.b16 %v1699, %v1699
        %v1764 = vpack.c.b16 %v1700, %v1700
        %v1765 = vpack.c.b16 %v1701, %v1701
        %v1766 = vpack.c.b16 %v1702, %v1702
        %v1767 = vpack.c.b16 %v1703, %v1703
        %v1768 = vpack.c.b16 %v1704, %v1704
        %v1769 = vpack.c.b16 %v1705, %v1705
        %v1770 = vpack.c.b16 %v1706, %v1706
        %v1771 = vpack.c.b16 %v1707, %v1707
        %v1772 = vpack.c.b16 %v1708, %v1708
        %v1773 = vpack.c.b16 %v1709, %v1709
        %v1774 = vpack.c.b16 %v1710, %v1710
        %v1775 = vpack.c.b16 %v1711, %v1711
        %v1776 = vpack.c.b16 %v1712, %v1712
        %v1777 = vpack.c.b16 %v1713, %v1713
        %v1778 = vpack.c.b16 %v1714, %v1714
        %v1779 = vpack.c.b16 %v1715, %v1715
        %v1780 = vpack.c.b16 %v1716, %v1716
        %v1781 = vpack.c.b16 %v1717, %v1717
        %v1782 = vpack.c.b16 %v1718, %v1718
        %v1783 = vpack.c.b16 %v1719, %v1719
        %v1784 = vpack.c.b16 %v1720, %v1720
        %v1785 = vpack.c.b16 %v1721, %v1721
        %v1786 = vpack.c.b16 %v1722, %v1722
        %v1787 = vpack.c.b16 %v1723, %v1723
        %v1788 = vpack.c.b16 %v1724, %v1724
        %v1789 = vpack.c.b16 %v1725, %v1725
        %1854 = vst [vmem:[%s329] sm:$0xf] %v1726
        %1855 = vst [vmem:[%s329 + $0x4] sm:$0xf] %v1727
        %1856 = vst [vmem:[%s329 + $0x8] sm:$0xf] %v1728
        %1857 = vst [vmem:[%s329 + $0xc] sm:$0xf] %v1729
        %1858 = vst [vmem:[%s329 + $0x10] sm:$0xf] %v1730
        %1859 = vst [vmem:[%s329 + $0x14] sm:$0xf] %v1731
        %1860 = vst [vmem:[%s329 + $0x18] sm:$0xf] %v1732
        %1861 = vst [vmem:[%s329 + $0x1c] sm:$0xf] %v1733
        %1862 = vst [vmem:[%s329 + $0x20] sm:$0xf] %v1734
        %1863 = vst [vmem:[%s329 + $0x24] sm:$0xf] %v1735
        %1864 = vst [vmem:[%s329 + $0x28] sm:$0xf] %v1736
        %1865 = vst [vmem:[%s329 + $0x2c] sm:$0xf] %v1737
        %1866 = vst [vmem:[%s329 + $0x30] sm:$0xf] %v1738
        %1867 = vst [vmem:[%s329 + $0x34] sm:$0xf] %v1739
        %1868 = vst [vmem:[%s329 + $0x38] sm:$0xf] %v1740
        %1869 = vst [vmem:[%s329 + $0x3c] sm:$0xf] %v1741
        %1870 = vst [vmem:[%s329 + $0x40] sm:$0xf] %v1742
        %1871 = vst [vmem:[%s329 + $0x44] sm:$0xf] %v1743
        %1872 = vst [vmem:[%s329 + $0x48] sm:$0xf] %v1744
        %1873 = vst [vmem:[%s329 + $0x4c] sm:$0xf] %v1745
        %1874 = vst [vmem:[%s329 + $0x50] sm:$0xf] %v1746
        %1875 = vst [vmem:[%s329 + $0x54] sm:$0xf] %v1747
        %1876 = vst [vmem:[%s329 + $0x58] sm:$0xf] %v1748
        %1877 = vst [vmem:[%s329 + $0x5c] sm:$0xf] %v1749
        %1878 = vst [vmem:[%s329 + $0x60] sm:$0xf] %v1750
        %1879 = vst [vmem:[%s329 + $0x64] sm:$0xf] %v1751
        %1880 = vst [vmem:[%s329 + $0x68] sm:$0xf] %v1752
        %1881 = vst [vmem:[%s329 + $0x6c] sm:$0xf] %v1753
        %1882 = vst [vmem:[%s329 + $0x70] sm:$0xf] %v1754
        %1883 = vst [vmem:[%s329 + $0x74] sm:$0xf] %v1755
        %1884 = vst [vmem:[%s329 + $0x78] sm:$0xf] %v1756
        %1885 = vst [vmem:[%s329 + $0x7c] sm:$0xf] %v1757
        %1886 = vst [vmem:[%s329 + $0x80] sm:$0xf] %v1758
        %1887 = vst [vmem:[%s329 + $0x84] sm:$0xf] %v1759
        %1888 = vst [vmem:[%s329 + $0x88] sm:$0xf] %v1760
        %1889 = vst [vmem:[%s329 + $0x8c] sm:$0xf] %v1761
        %1890 = vst [vmem:[%s329 + $0x90] sm:$0xf] %v1762
        %1891 = vst [vmem:[%s329 + $0x94] sm:$0xf] %v1763
        %1892 = vst [vmem:[%s329 + $0x98] sm:$0xf] %v1764
        %1893 = vst [vmem:[%s329 + $0x9c] sm:$0xf] %v1765
        %1894 = vst [vmem:[%s329 + $0xa0] sm:$0xf] %v1766
        %1895 = vst [vmem:[%s329 + $0xa4] sm:$0xf] %v1767
        %1896 = vst [vmem:[%s329 + $0xa8] sm:$0xf] %v1768
        %1897 = vst [vmem:[%s329 + $0xac] sm:$0xf] %v1769
        %1898 = vst [vmem:[%s329 + $0xb0] sm:$0xf] %v1770
        %1899 = vst [vmem:[%s329 + $0xb4] sm:$0xf] %v1771
        %1900 = vst [vmem:[%s329 + $0xb8] sm:$0xf] %v1772
        %1901 = vst [vmem:[%s329 + $0xbc] sm:$0xf] %v1773
        %1902 = vst [vmem:[%s329 + $0xc0] sm:$0xf] %v1774
        %1903 = vst [vmem:[%s329 + $0xc4] sm:$0xf] %v1775
        %1904 = vst [vmem:[%s329 + $0xc8] sm:$0xf] %v1776
        %1905 = vst [vmem:[%s329 + $0xcc] sm:$0xf] %v1777
        %1906 = vst [vmem:[%s329 + $0xd0] sm:$0xf] %v1778
        %1907 = vst [vmem:[%s329 + $0xd4] sm:$0xf] %v1779
        %1908 = vst [vmem:[%s329 + $0xd8] sm:$0xf] %v1780
        %1909 = vst [vmem:[%s329 + $0xdc] sm:$0xf] %v1781
        %1910 = vst [vmem:[%s329 + $0xe0] sm:$0xf] %v1782
        %1911 = vst [vmem:[%s329 + $0xe4] sm:$0xf] %v1783
        %1912 = vst [vmem:[%s329 + $0xe8] sm:$0xf] %v1784
        %1913 = vst [vmem:[%s329 + $0xec] sm:$0xf] %v1785
        %1914 = vst [vmem:[%s329 + $0xf0] sm:$0xf] %v1786
        %1915 = vst [vmem:[%s329 + $0xf4] sm:$0xf] %v1787
        %1916 = vst [vmem:[%s329 + $0xf8] sm:$0xf] %v1788
        %1917 = vst [vmem:[%s329 + $0xfc] sm:$0xf] %v1789
        %p1918 = scmp.ne.s32.totalorder %s30, 1
        // Predicated region
        $region53: #{tpu_custom_call.1} parent=35 // pred_check
          %p1919 = pneg %p1918
        $region54: #{tpu_custom_call.1} parent=35 // pred_check_branch
          %1921 = sbr.rel (%p1919) target = $region56
        $region55: #{tpu_custom_call.1} parent=35 // pred_region
          %v1922 = vld [vmem:[#allocation2] sm:$0x1]
          %v1923 = vadd.f32 %v1150, %v1151
          %v1924 = vadd.f32 %v1923, %v1152
          %v1925 = vadd.f32 %v1924, %v1153
          %v1926 = vadd.f32 %v1925, %v1154
          %v1927 = vadd.f32 %v1926, %v1155
          %v1928 = vadd.f32 %v1927, %v1156
          %v1929 = vadd.f32 %v1928, %v1157
          %v1930 = vadd.f32 %v1929, %v1158
          %v1931 = vadd.f32 %v1930, %v1159
          %v1932 = vadd.f32 %v1931, %v1160
          %v1933 = vadd.f32 %v1932, %v1161
          %v1934 = vadd.f32 %v1933, %v1162
          %v1935 = vadd.f32 %v1934, %v1163
          %v1936 = vadd.f32 %v1935, %v1164
          %v1937 = vadd.f32 %v1936, %v1165
          %v1938 = vadd.f32 %v1937, %v1166
          %v1939 = vadd.f32 %v1938, %v1167
          %v1940 = vadd.f32 %v1939, %v1168
          %v1941 = vadd.f32 %v1940, %v1169
          %v1942 = vadd.f32 %v1941, %v1170
          %v1943 = vadd.f32 %v1942, %v1171
          %v1944 = vadd.f32 %v1943, %v1172
          %v1945 = vadd.f32 %v1944, %v1173
          %v1946 = vadd.f32 %v1945, %v1174
          %v1947 = vadd.f32 %v1946, %v1175
          %v1948 = vadd.f32 %v1947, %v1176
          %v1949 = vadd.f32 %v1948, %v1177
          %v1950 = vadd.f32 %v1949, %v1178
          %v1951 = vadd.f32 %v1950, %v1179
          %v1952 = vadd.f32 %v1951, %v1180
          %v1953 = vadd.f32 %v1952, %v1181
          %v1954 = vadd.f32 %v1953, %v1182
          %v1955 = vadd.f32 %v1954, %v1183
          %v1956 = vadd.f32 %v1955, %v1184
          %v1957 = vadd.f32 %v1956, %v1185
          %v1958 = vadd.f32 %v1957, %v1186
          %v1959 = vadd.f32 %v1958, %v1187
          %v1960 = vadd.f32 %v1959, %v1188
          %v1961 = vadd.f32 %v1960, %v1189
          %v1962 = vadd.f32 %v1961, %v1190
          %v1963 = vadd.f32 %v1962, %v1191
          %v1964 = vadd.f32 %v1963, %v1192
          %v1965 = vadd.f32 %v1964, %v1193
          %v1966 = vadd.f32 %v1965, %v1194
          %v1967 = vadd.f32 %v1966, %v1195
          %v1968 = vadd.f32 %v1967, %v1196
          %v1969 = vadd.f32 %v1968, %v1197
          %v1970 = vadd.f32 %v1969, %v1198
          %v1971 = vadd.f32 %v1970, %v1199
          %v1972 = vadd.f32 %v1971, %v1200
          %v1973 = vadd.f32 %v1972, %v1201
          %v1974 = vadd.f32 %v1973, %v1202
          %v1975 = vadd.f32 %v1974, %v1203
          %v1976 = vadd.f32 %v1975, %v1204
          %v1977 = vadd.f32 %v1976, %v1205
          %v1978 = vadd.f32 %v1977, %v1206
          %v1979 = vadd.f32 %v1978, %v1207
          %v1980 = vadd.f32 %v1979, %v1208
          %v1981 = vadd.f32 %v1980, %v1209
          %v1982 = vadd.f32 %v1981, %v1210
          %v1983 = vadd.f32 %v1982, %v1211
          %v1984 = vadd.f32 %v1983, %v1212
          %v1985 = vadd.f32 %v1984, %v1213
          %v1986 = vrot.slane %v1985, 4
          %v1987 = vadd.f32 %v1985, %v1986
          %v1988 = vrot.slane %v1987, 2
          %v1989 = vadd.f32 %v1987, %v1988
          %v1990 = vrot.slane %v1989, 1
          %v1991 = vadd.f32 %v1989, %v1990
          %v1992 = vadd.f32 %v1922, %v1991
          %1993 = vst [vmem:[#allocation2] sm:$0x1] %v1992
        $region56: #{tpu_custom_call.1} parent=35 // pred_fallthru
          _
        %p1994 = scmp.eq.s32.totalorder %s30, 1
        // Predicated region
        $region57: #{tpu_custom_call.1} parent=35 // pred_check
          %p1995 = pneg %p1994
        $region58: #{tpu_custom_call.1} parent=35 // pred_check_branch
          %1997 = sbr.rel (%p1995) target = $region60
        $region59: #{tpu_custom_call.1} parent=35 // pred_region
          %v1998 = vlaneseq
          %v1999 = vshrl.u32 %v1998, 7
          %v2000 = vadd.s32 %v1999, 8
          %v2001 = vadd.s32 %v1999, 16
          %v2002 = vadd.s32 %v1999, 24
          %v2003 = vadd.s32 %v1999, 32
          %v2004 = vadd.s32 %v1999, 40
          %v2005 = vadd.s32 %v1999, 48
          %v2006 = vadd.s32 %v1999, 56
          %v2007 = vadd.s32 %v1999, 64
          %v2008 = vadd.s32 %v1999, 72
          %v2009 = vadd.s32 %v1999, 80
          %v2010 = vadd.s32 %v1999, 88
          %v2011 = vadd.s32 %v1999, 96
          %v2012 = vadd.s32 %v1999, 104
          %v2013 = vadd.s32 %v1999, 112
          %v2014 = vadd.s32 %v1999, 120
          %v2015 = vadd.s32 %v1999, 128
          %v2016 = vadd.s32 %v1999, 136
          %v2017 = vadd.s32 %v1999, 144
          %v2018 = vadd.s32 %v1999, 152
          %v2019 = vadd.s32 %v1999, 160
          %v2020 = vadd.s32 %v1999, 168
          %v2021 = vadd.s32 %v1999, 176
          %v2022 = vadd.s32 %v1999, 184
          %v2023 = vadd.s32 %v1999, 192
          %v2024 = vadd.s32 %v1999, 200
          %v2025 = vadd.s32 %v1999, 208
          %v2026 = vadd.s32 %v1999, 216
          %v2027 = vadd.s32 %v1999, 224
          %v2028 = vadd.s32 %v1999, 232
          %v2029 = vadd.s32 %v1999, 240
          %v2030 = vadd.s32 %v1999, 248
          %v2031 = vadd.s32 %v1999, 256
          %v2032 = vadd.s32 %v1999, 264
          %v2033 = vadd.s32 %v1999, 272
          %v2034 = vadd.s32 %v1999, 280
          %v2035 = vadd.s32 %v1999, 288
          %v2036 = vadd.s32 %v1999, 296
          %v2037 = vadd.s32 %v1999, 304
          %v2038 = vadd.s32 %v1999, 312
          %v2039 = vadd.s32 %v1999, 320
          %v2040 = vadd.s32 %v1999, 328
          %v2041 = vadd.s32 %v1999, 336
          %v2042 = vadd.s32 %v1999, 344
          %v2043 = vadd.s32 %v1999, 352
          %v2044 = vadd.s32 %v1999, 360
          %v2045 = vadd.s32 %v1999, 368
          %v2046 = vadd.s32 %v1999, 376
          %v2047 = vadd.s32 %v1999, 384
          %v2048 = vadd.s32 %v1999, 392
          %v2049 = vadd.s32 %v1999, 400
          %v2050 = vadd.s32 %v1999, 408
          %v2051 = vadd.s32 %v1999, 416
          %v2052 = vadd.s32 %v1999, 424
          %v2053 = vadd.s32 %v1999, 432
          %v2054 = vadd.s32 %v1999, 440
          %v2055 = vadd.s32 %v1999, 448
          %v2056 = vadd.s32 %v1999, 456
          %v2057 = vadd.s32 %v1999, 464
          %v2058 = vadd.s32 %v1999, 472
          %v2059 = vadd.s32 %v1999, 480
          %v2060 = vadd.s32 %v1999, 488
          %v2061 = vadd.s32 %v1999, 496
          %v2062 = vadd.s32 %v1999, 504
          %v2063 = vld [vmem:[#allocation2] sm:$0x1]
          %vm2064 = vcmp.lt.s32.totalorder %v1999, 128
          %vm2065 = vcmp.lt.s32.totalorder %v2000, 128
          %vm2066 = vcmp.lt.s32.totalorder %v2001, 128
          %vm2067 = vcmp.lt.s32.totalorder %v2002, 128
          %vm2068 = vcmp.lt.s32.totalorder %v2003, 128
          %vm2069 = vcmp.lt.s32.totalorder %v2004, 128
          %vm2070 = vcmp.lt.s32.totalorder %v2005, 128
          %vm2071 = vcmp.lt.s32.totalorder %v2006, 128
          %vm2072 = vcmp.lt.s32.totalorder %v2007, 128
          %vm2073 = vcmp.lt.s32.totalorder %v2008, 128
          %vm2074 = vcmp.lt.s32.totalorder %v2009, 128
          %vm2075 = vcmp.lt.s32.totalorder %v2010, 128
          %vm2076 = vcmp.lt.s32.totalorder %v2011, 128
          %vm2077 = vcmp.lt.s32.totalorder %v2012, 128
          %vm2078 = vcmp.lt.s32.totalorder %v2013, 128
          %vm2079 = vcmp.lt.s32.totalorder %v2014, 128
          %vm2080 = vcmp.lt.s32.totalorder %v2015, 128
          %vm2081 = vcmp.lt.s32.totalorder %v2016, 128
          %vm2082 = vcmp.lt.s32.totalorder %v2017, 128
          %vm2083 = vcmp.lt.s32.totalorder %v2018, 128
          %vm2084 = vcmp.lt.s32.totalorder %v2019, 128
          %vm2085 = vcmp.lt.s32.totalorder %v2020, 128
          %vm2086 = vcmp.lt.s32.totalorder %v2021, 128
          %vm2087 = vcmp.lt.s32.totalorder %v2022, 128
          %vm2088 = vcmp.lt.s32.totalorder %v2023, 128
          %vm2089 = vcmp.lt.s32.totalorder %v2024, 128
          %vm2090 = vcmp.lt.s32.totalorder %v2025, 128
          %vm2091 = vcmp.lt.s32.totalorder %v2026, 128
          %vm2092 = vcmp.lt.s32.totalorder %v2027, 128
          %vm2093 = vcmp.lt.s32.totalorder %v2028, 128
          %vm2094 = vcmp.lt.s32.totalorder %v2029, 128
          %vm2095 = vcmp.lt.s32.totalorder %v2030, 128
          %vm2096 = vcmp.lt.s32.totalorder %v2031, 128
          %vm2097 = vcmp.lt.s32.totalorder %v2032, 128
          %vm2098 = vcmp.lt.s32.totalorder %v2033, 128
          %vm2099 = vcmp.lt.s32.totalorder %v2034, 128
          %vm2100 = vcmp.lt.s32.totalorder %v2035, 128
          %vm2101 = vcmp.lt.s32.totalorder %v2036, 128
          %vm2102 = vcmp.lt.s32.totalorder %v2037, 128
          %vm2103 = vcmp.lt.s32.totalorder %v2038, 128
          %vm2104 = vcmp.lt.s32.totalorder %v2039, 128
          %vm2105 = vcmp.lt.s32.totalorder %v2040, 128
          %vm2106 = vcmp.lt.s32.totalorder %v2041, 128
          %vm2107 = vcmp.lt.s32.totalorder %v2042, 128
          %vm2108 = vcmp.lt.s32.totalorder %v2043, 128
          %vm2109 = vcmp.lt.s32.totalorder %v2044, 128
          %vm2110 = vcmp.lt.s32.totalorder %v2045, 128
          %vm2111 = vcmp.lt.s32.totalorder %v2046, 128
          %vm2112 = vcmp.lt.s32.totalorder %v2047, 128
          %vm2113 = vcmp.lt.s32.totalorder %v2048, 128
          %vm2114 = vcmp.lt.s32.totalorder %v2049, 128
          %vm2115 = vcmp.lt.s32.totalorder %v2050, 128
          %vm2116 = vcmp.lt.s32.totalorder %v2051, 128
          %vm2117 = vcmp.lt.s32.totalorder %v2052, 128
          %vm2118 = vcmp.lt.s32.totalorder %v2053, 128
          %vm2119 = vcmp.lt.s32.totalorder %v2054, 128
          %vm2120 = vcmp.lt.s32.totalorder %v2055, 128
          %vm2121 = vcmp.lt.s32.totalorder %v2056, 128
          %vm2122 = vcmp.lt.s32.totalorder %v2057, 128
          %vm2123 = vcmp.lt.s32.totalorder %v2058, 128
          %vm2124 = vcmp.lt.s32.totalorder %v2059, 128
          %vm2125 = vcmp.lt.s32.totalorder %v2060, 128
          %vm2126 = vcmp.lt.s32.totalorder %v2061, 128
          %vm2127 = vcmp.lt.s32.totalorder %v2062, 128
          %v2128 = vsel %vm2064, 1, 0
          %v2129 = vsel %vm2065, 1, 0
          %v2130 = vsel %vm2066, 1, 0
          %v2131 = vsel %vm2067, 1, 0
          %v2132 = vsel %vm2068, 1, 0
          %v2133 = vsel %vm2069, 1, 0
          %v2134 = vsel %vm2070, 1, 0
          %v2135 = vsel %vm2071, 1, 0
          %v2136 = vsel %vm2072, 1, 0
          %v2137 = vsel %vm2073, 1, 0
          %v2138 = vsel %vm2074, 1, 0
          %v2139 = vsel %vm2075, 1, 0
          %v2140 = vsel %vm2076, 1, 0
          %v2141 = vsel %vm2077, 1, 0
          %v2142 = vsel %vm2078, 1, 0
          %v2143 = vsel %vm2079, 1, 0
          %v2144 = vsel %vm2080, 1, 0
          %v2145 = vsel %vm2081, 1, 0
          %v2146 = vsel %vm2082, 1, 0
          %v2147 = vsel %vm2083, 1, 0
          %v2148 = vsel %vm2084, 1, 0
          %v2149 = vsel %vm2085, 1, 0
          %v2150 = vsel %vm2086, 1, 0
          %v2151 = vsel %vm2087, 1, 0
          %v2152 = vsel %vm2088, 1, 0
          %v2153 = vsel %vm2089, 1, 0
          %v2154 = vsel %vm2090, 1, 0
          %v2155 = vsel %vm2091, 1, 0
          %v2156 = vsel %vm2092, 1, 0
          %v2157 = vsel %vm2093, 1, 0
          %v2158 = vsel %vm2094, 1, 0
          %v2159 = vsel %vm2095, 1, 0
          %v2160 = vsel %vm2096, 1, 0
          %v2161 = vsel %vm2097, 1, 0
          %v2162 = vsel %vm2098, 1, 0
          %v2163 = vsel %vm2099, 1, 0
          %v2164 = vsel %vm2100, 1, 0
          %v2165 = vsel %vm2101, 1, 0
          %v2166 = vsel %vm2102, 1, 0
          %v2167 = vsel %vm2103, 1, 0
          %v2168 = vsel %vm2104, 1, 0
          %v2169 = vsel %vm2105, 1, 0
          %v2170 = vsel %vm2106, 1, 0
          %v2171 = vsel %vm2107, 1, 0
          %v2172 = vsel %vm2108, 1, 0
          %v2173 = vsel %vm2109, 1, 0
          %v2174 = vsel %vm2110, 1, 0
          %v2175 = vsel %vm2111, 1, 0
          %v2176 = vsel %vm2112, 1, 0
          %v2177 = vsel %vm2113, 1, 0
          %v2178 = vsel %vm2114, 1, 0
          %v2179 = vsel %vm2115, 1, 0
          %v2180 = vsel %vm2116, 1, 0
          %v2181 = vsel %vm2117, 1, 0
          %v2182 = vsel %vm2118, 1, 0
          %v2183 = vsel %vm2119, 1, 0
          %v2184 = vsel %vm2120, 1, 0
          %v2185 = vsel %vm2121, 1, 0
          %v2186 = vsel %vm2122, 1, 0
          %v2187 = vsel %vm2123, 1, 0
          %v2188 = vsel %vm2124, 1, 0
          %v2189 = vsel %vm2125, 1, 0
          %v2190 = vsel %vm2126, 1, 0
          %v2191 = vsel %vm2127, 1, 0
          %vm2192 = vcmp.eq.s32.totalorder %v2128, 1
          %vm2193 = vcmp.eq.s32.totalorder %v2129, 1
          %vm2194 = vcmp.eq.s32.totalorder %v2130, 1
          %vm2195 = vcmp.eq.s32.totalorder %v2131, 1
          %vm2196 = vcmp.eq.s32.totalorder %v2132, 1
          %vm2197 = vcmp.eq.s32.totalorder %v2133, 1
          %vm2198 = vcmp.eq.s32.totalorder %v2134, 1
          %vm2199 = vcmp.eq.s32.totalorder %v2135, 1
          %vm2200 = vcmp.eq.s32.totalorder %v2136, 1
          %vm2201 = vcmp.eq.s32.totalorder %v2137, 1
          %vm2202 = vcmp.eq.s32.totalorder %v2138, 1
          %vm2203 = vcmp.eq.s32.totalorder %v2139, 1
          %vm2204 = vcmp.eq.s32.totalorder %v2140, 1
          %vm2205 = vcmp.eq.s32.totalorder %v2141, 1
          %vm2206 = vcmp.eq.s32.totalorder %v2142, 1
          %vm2207 = vcmp.eq.s32.totalorder %v2143, 1
          %vm2208 = vcmp.eq.s32.totalorder %v2144, 1
          %vm2209 = vcmp.eq.s32.totalorder %v2145, 1
          %vm2210 = vcmp.eq.s32.totalorder %v2146, 1
          %vm2211 = vcmp.eq.s32.totalorder %v2147, 1
          %vm2212 = vcmp.eq.s32.totalorder %v2148, 1
          %vm2213 = vcmp.eq.s32.totalorder %v2149, 1
          %vm2214 = vcmp.eq.s32.totalorder %v2150, 1
          %vm2215 = vcmp.eq.s32.totalorder %v2151, 1
          %vm2216 = vcmp.eq.s32.totalorder %v2152, 1
          %vm2217 = vcmp.eq.s32.totalorder %v2153, 1
          %vm2218 = vcmp.eq.s32.totalorder %v2154, 1
          %vm2219 = vcmp.eq.s32.totalorder %v2155, 1
          %vm2220 = vcmp.eq.s32.totalorder %v2156, 1
          %vm2221 = vcmp.eq.s32.totalorder %v2157, 1
          %vm2222 = vcmp.eq.s32.totalorder %v2158, 1
          %vm2223 = vcmp.eq.s32.totalorder %v2159, 1
          %vm2224 = vcmp.eq.s32.totalorder %v2160, 1
          %vm2225 = vcmp.eq.s32.totalorder %v2161, 1
          %vm2226 = vcmp.eq.s32.totalorder %v2162, 1
          %vm2227 = vcmp.eq.s32.totalorder %v2163, 1
          %vm2228 = vcmp.eq.s32.totalorder %v2164, 1
          %vm2229 = vcmp.eq.s32.totalorder %v2165, 1
          %vm2230 = vcmp.eq.s32.totalorder %v2166, 1
          %vm2231 = vcmp.eq.s32.totalorder %v2167, 1
          %vm2232 = vcmp.eq.s32.totalorder %v2168, 1
          %vm2233 = vcmp.eq.s32.totalorder %v2169, 1
          %vm2234 = vcmp.eq.s32.totalorder %v2170, 1
          %vm2235 = vcmp.eq.s32.totalorder %v2171, 1
          %vm2236 = vcmp.eq.s32.totalorder %v2172, 1
          %vm2237 = vcmp.eq.s32.totalorder %v2173, 1
          %vm2238 = vcmp.eq.s32.totalorder %v2174, 1
          %vm2239 = vcmp.eq.s32.totalorder %v2175, 1
          %vm2240 = vcmp.eq.s32.totalorder %v2176, 1
          %vm2241 = vcmp.eq.s32.totalorder %v2177, 1
          %vm2242 = vcmp.eq.s32.totalorder %v2178, 1
          %vm2243 = vcmp.eq.s32.totalorder %v2179, 1
          %vm2244 = vcmp.eq.s32.totalorder %v2180, 1
          %vm2245 = vcmp.eq.s32.totalorder %v2181, 1
          %vm2246 = vcmp.eq.s32.totalorder %v2182, 1
          %vm2247 = vcmp.eq.s32.totalorder %v2183, 1
          %vm2248 = vcmp.eq.s32.totalorder %v2184, 1
          %vm2249 = vcmp.eq.s32.totalorder %v2185, 1
          %vm2250 = vcmp.eq.s32.totalorder %v2186, 1
          %vm2251 = vcmp.eq.s32.totalorder %v2187, 1
          %vm2252 = vcmp.eq.s32.totalorder %v2188, 1
          %vm2253 = vcmp.eq.s32.totalorder %v2189, 1
          %vm2254 = vcmp.eq.s32.totalorder %v2190, 1
          %vm2255 = vcmp.eq.s32.totalorder %v2191, 1
          %v2256 = vsel %vm2192, %v1150, 0.0
          %v2257 = vsel %vm2193, %v1151, 0.0
          %v2258 = vsel %vm2194, %v1152, 0.0
          %v2259 = vsel %vm2195, %v1153, 0.0
          %v2260 = vsel %vm2196, %v1154, 0.0
          %v2261 = vsel %vm2197, %v1155, 0.0
          %v2262 = vsel %vm2198, %v1156, 0.0
          %v2263 = vsel %vm2199, %v1157, 0.0
          %v2264 = vsel %vm2200, %v1158, 0.0
          %v2265 = vsel %vm2201, %v1159, 0.0
          %v2266 = vsel %vm2202, %v1160, 0.0
          %v2267 = vsel %vm2203, %v1161, 0.0
          %v2268 = vsel %vm2204, %v1162, 0.0
          %v2269 = vsel %vm2205, %v1163, 0.0
          %v2270 = vsel %vm2206, %v1164, 0.0
          %v2271 = vsel %vm2207, %v1165, 0.0
          %v2272 = vsel %vm2208, %v1166, 0.0
          %v2273 = vsel %vm2209, %v1167, 0.0
          %v2274 = vsel %vm2210, %v1168, 0.0
          %v2275 = vsel %vm2211, %v1169, 0.0
          %v2276 = vsel %vm2212, %v1170, 0.0
          %v2277 = vsel %vm2213, %v1171, 0.0
          %v2278 = vsel %vm2214, %v1172, 0.0
          %v2279 = vsel %vm2215, %v1173, 0.0
          %v2280 = vsel %vm2216, %v1174, 0.0
          %v2281 = vsel %vm2217, %v1175, 0.0
          %v2282 = vsel %vm2218, %v1176, 0.0
          %v2283 = vsel %vm2219, %v1177, 0.0
          %v2284 = vsel %vm2220, %v1178, 0.0
          %v2285 = vsel %vm2221, %v1179, 0.0
          %v2286 = vsel %vm2222, %v1180, 0.0
          %v2287 = vsel %vm2223, %v1181, 0.0
          %v2288 = vsel %vm2224, %v1182, 0.0
          %v2289 = vsel %vm2225, %v1183, 0.0
          %v2290 = vsel %vm2226, %v1184, 0.0
          %v2291 = vsel %vm2227, %v1185, 0.0
          %v2292 = vsel %vm2228, %v1186, 0.0
          %v2293 = vsel %vm2229, %v1187, 0.0
          %v2294 = vsel %vm2230, %v1188, 0.0
          %v2295 = vsel %vm2231, %v1189, 0.0
          %v2296 = vsel %vm2232, %v1190, 0.0
          %v2297 = vsel %vm2233, %v1191, 0.0
          %v2298 = vsel %vm2234, %v1192, 0.0
          %v2299 = vsel %vm2235, %v1193, 0.0
          %v2300 = vsel %vm2236, %v1194, 0.0
          %v2301 = vsel %vm2237, %v1195, 0.0
          %v2302 = vsel %vm2238, %v1196, 0.0
          %v2303 = vsel %vm2239, %v1197, 0.0
          %v2304 = vsel %vm2240, %v1198, 0.0
          %v2305 = vsel %vm2241, %v1199, 0.0
          %v2306 = vsel %vm2242, %v1200, 0.0
          %v2307 = vsel %vm2243, %v1201, 0.0
          %v2308 = vsel %vm2244, %v1202, 0.0
          %v2309 = vsel %vm2245, %v1203, 0.0
          %v2310 = vsel %vm2246, %v1204, 0.0
          %v2311 = vsel %vm2247, %v1205, 0.0
          %v2312 = vsel %vm2248, %v1206, 0.0
          %v2313 = vsel %vm2249, %v1207, 0.0
          %v2314 = vsel %vm2250, %v1208, 0.0
          %v2315 = vsel %vm2251, %v1209, 0.0
          %v2316 = vsel %vm2252, %v1210, 0.0
          %v2317 = vsel %vm2253, %v1211, 0.0
          %v2318 = vsel %vm2254, %v1212, 0.0
          %v2319 = vsel %vm2255, %v1213, 0.0
          %v2320 = vadd.f32 %v2256, %v2257
          %v2321 = vadd.f32 %v2320, %v2258
          %v2322 = vadd.f32 %v2321, %v2259
          %v2323 = vadd.f32 %v2322, %v2260
          %v2324 = vadd.f32 %v2323, %v2261
          %v2325 = vadd.f32 %v2324, %v2262
          %v2326 = vadd.f32 %v2325, %v2263
          %v2327 = vadd.f32 %v2326, %v2264
          %v2328 = vadd.f32 %v2327, %v2265
          %v2329 = vadd.f32 %v2328, %v2266
          %v2330 = vadd.f32 %v2329, %v2267
          %v2331 = vadd.f32 %v2330, %v2268
          %v2332 = vadd.f32 %v2331, %v2269
          %v2333 = vadd.f32 %v2332, %v2270
          %v2334 = vadd.f32 %v2333, %v2271
          %v2335 = vadd.f32 %v2334, %v2272
          %v2336 = vadd.f32 %v2335, %v2273
          %v2337 = vadd.f32 %v2336, %v2274
          %v2338 = vadd.f32 %v2337, %v2275
          %v2339 = vadd.f32 %v2338, %v2276
          %v2340 = vadd.f32 %v2339, %v2277
          %v2341 = vadd.f32 %v2340, %v2278
          %v2342 = vadd.f32 %v2341, %v2279
          %v2343 = vadd.f32 %v2342, %v2280
          %v2344 = vadd.f32 %v2343, %v2281
          %v2345 = vadd.f32 %v2344, %v2282
          %v2346 = vadd.f32 %v2345, %v2283
          %v2347 = vadd.f32 %v2346, %v2284
          %v2348 = vadd.f32 %v2347, %v2285
          %v2349 = vadd.f32 %v2348, %v2286
          %v2350 = vadd.f32 %v2349, %v2287
          %v2351 = vadd.f32 %v2350, %v2288
          %v2352 = vadd.f32 %v2351, %v2289
          %v2353 = vadd.f32 %v2352, %v2290
          %v2354 = vadd.f32 %v2353, %v2291
          %v2355 = vadd.f32 %v2354, %v2292
          %v2356 = vadd.f32 %v2355, %v2293
          %v2357 = vadd.f32 %v2356, %v2294
          %v2358 = vadd.f32 %v2357, %v2295
          %v2359 = vadd.f32 %v2358, %v2296
          %v2360 = vadd.f32 %v2359, %v2297
          %v2361 = vadd.f32 %v2360, %v2298
          %v2362 = vadd.f32 %v2361, %v2299
          %v2363 = vadd.f32 %v2362, %v2300
          %v2364 = vadd.f32 %v2363, %v2301
          %v2365 = vadd.f32 %v2364, %v2302
          %v2366 = vadd.f32 %v2365, %v2303
          %v2367 = vadd.f32 %v2366, %v2304
          %v2368 = vadd.f32 %v2367, %v2305
          %v2369 = vadd.f32 %v2368, %v2306
          %v2370 = vadd.f32 %v2369, %v2307
          %v2371 = vadd.f32 %v2370, %v2308
          %v2372 = vadd.f32 %v2371, %v2309
          %v2373 = vadd.f32 %v2372, %v2310
          %v2374 = vadd.f32 %v2373, %v2311
          %v2375 = vadd.f32 %v2374, %v2312
          %v2376 = vadd.f32 %v2375, %v2313
          %v2377 = vadd.f32 %v2376, %v2314
          %v2378 = vadd.f32 %v2377, %v2315
          %v2379 = vadd.f32 %v2378, %v2316
          %v2380 = vadd.f32 %v2379, %v2317
          %v2381 = vadd.f32 %v2380, %v2318
          %v2382 = vadd.f32 %v2381, %v2319
          %v2383 = vrot.slane %v2382, 4
          %v2384 = vadd.f32 %v2382, %v2383
          %v2385 = vrot.slane %v2384, 2
          %v2386 = vadd.f32 %v2384, %v2385
          %v2387 = vrot.slane %v2386, 1
          %v2388 = vadd.f32 %v2386, %v2387
          %v2389 = vadd.f32 %v2063, %v2388
          %2390 = vst [vmem:[#allocation2] sm:$0x1] %v2389
          %v2391 = vld [vmem:[#allocation2] sm:$0x1]
          %v2392 = vrcp.pop 640.0
          %v2393 = vmul.f32 %v2391, %v2392
          %v2394 = vxor.u32 %v2393, 2147483648
          %v2395 = vmul.f32 %v2394, 1.442695
          %v2396 = vpow.pop %v2395
          %v2397 = vadd.f32 %v2396, 1.0
          %v2398 = vrcp.pop %v2397
          %v2399 = vmul.f32 1.0, %v2398
          %2400 = vst [vmem:[#allocation12] sm:$0x1] %v2399
        $region60: #{tpu_custom_call.1} parent=35 // pred_fallthru
          _
        %s2401 = sand.u32 %s132, 1
        %s2402 = scalar_lea.sflag [#allocation5], %s2401
        %s2403 = sand.u32 %s132, 1
        %s2404 = smul.addr %s2403, 256
        %s2405 = scalar_lea.vmem [#allocation9], %s2404
        %s2406 = sand.u32 %s30, 1
        %s2407 = scalar_lea.sflag [#allocation11], %s2406
        %s2408 = sand.u32 %s158, 1
        %s2409 = smul.addr %s2408, 256
        %s2410 = scalar_lea.vmem [#allocation10], %s2409
        // Predicated region
        $region61: #{tpu_custom_call.1} parent=35 // pred_check
          %p2411 = pneg %p142
        $region62: #{tpu_custom_call.1} parent=35 // pred_check_branch
          %2413 = sbr.rel (%p2411) target = $region64
        $region63: #{tpu_custom_call.1} parent=35 // pred_region
          %s2414 = smul.u32 64, %s30
          %s2416 = ssub.s32 4096, 4096
          %2417 = vsyncadd %s2402, %s2416
          %s2418 = smul.addr %s2414, 64
          %s2419 = scalar_lea.hbm %s4, %s2418
          %s2420 = sshll.u32 %s2405, 4
          %s2421 = int_to_ptr.vmem [resolvable:$true] %s2420
          %2426 = dma.vmem_to_hbm [thread:$0]  %s2421, 4096, %s2419, %s2402, 64, 64, 4
        $region64: #{tpu_custom_call.1} parent=35 // pred_fallthru
          _
        // Predicated region
        $region65: #{tpu_custom_call.1} parent=35 // pred_check
          %p2427 = pneg %p168
        $region66: #{tpu_custom_call.1} parent=35 // pred_check_branch
          %2429 = sbr.rel (%p2427) target = $region68
        $region67: #{tpu_custom_call.1} parent=35 // pred_region
          %s2430 = smul.u32 64, %s30
          %s2432 = ssub.s32 4096, 4096
          %2433 = vsyncadd %s2407, %s2432
          %s2434 = smul.addr %s2430, 64
          %s2435 = scalar_lea.hbm %s5, %s2434
          %s2436 = sshll.u32 %s2410, 4
          %s2437 = int_to_ptr.vmem [resolvable:$true] %s2436
          %2442 = dma.vmem_to_hbm [thread:$0]  %s2437, 4096, %s2435, %s2407, 64, 64, 4
        $region68: #{tpu_custom_call.1} parent=35 // pred_fallthru
          _
        // Predicated region
        $region69: #{tpu_custom_call.1} parent=35 // pred_check
          %p2443 = pneg %p189
        $region70: #{tpu_custom_call.1} parent=35 // pred_check_branch
          %2445 = sbr.rel (%p2443) target = $region72
        $region71: #{tpu_custom_call.1} parent=35 // pred_region
          %s2447 = ssub.s32 16, 16
          %2448 = vsyncadd [#allocation11], %s2447
          %s2450 = sshll.u32 [#allocation12], 4
          %s2451 = int_to_ptr.vmem [resolvable:$true] %s2450
          %2453 = dma.vmem_to_hbm [thread:$0]  %s2451, 16, %s6, [#allocation11]
        $region72: #{tpu_custom_call.1} parent=35 // pred_fallthru
          _
        // Predicated region
        $region73: #{tpu_custom_call.1} parent=35 // pred_check
          %p2454 = pneg %p189
        $region74: #{tpu_custom_call.1} parent=35 // pred_check_branch
          %2456 = sbr.rel (%p2454) target = $region76
        $region75: #{tpu_custom_call.1} parent=35 // pred_region
          %2457 = dma.done [#allocation11], 16
        $region76: #{tpu_custom_call.1} parent=35 // pred_fallthru
          _
      $region36: #{tpu_custom_call.1} parent=5 // pred_fallthru
        _
      %p2458 = scmp.le.s32.totalorder 2, %s25
      // Predicated region
      $region77: #{tpu_custom_call.1} parent=5 // pred_check
        %p2459 = pneg %p2458
      $region78: #{tpu_custom_call.1} parent=5 // pred_check_branch
        %2461 = sbr.rel (%p2459) target = $region80
      $region79: #{tpu_custom_call.1} parent=5 // pred_region
        %s2462 = ssub.s32 %s25, 2
        // Predicated region
        $region81: #{tpu_custom_call.1} parent=79 // pred_check
          %p2463 = pneg %p148
        $region82: #{tpu_custom_call.1} parent=79 // pred_check_branch
          %2465 = sbr.rel (%p2463) target = $region84
        $region83: #{tpu_custom_call.1} parent=79 // pred_region
          %s2466 = sand.u32 %s133, 1
          %s2467 = scalar_lea.sflag [#allocation5], %s2466
          %s2468 = sand.u32 %s133, 1
          %s2469 = smul.addr %s2468, 256
          %s2470 = scalar_lea.vmem [#allocation9], %s2469
          %2471 = dma.done %s2467, 4096
        $region84: #{tpu_custom_call.1} parent=79 // pred_fallthru
          _
        // Predicated region
        $region85: #{tpu_custom_call.1} parent=79 // pred_check
          %p2472 = pneg %p174
        $region86: #{tpu_custom_call.1} parent=79 // pred_check_branch
          %2474 = sbr.rel (%p2472) target = $region88
        $region87: #{tpu_custom_call.1} parent=79 // pred_region
          %s2475 = sand.u32 %s31, 1
          %s2476 = scalar_lea.sflag [#allocation11], %s2475
          %s2477 = sand.u32 %s159, 1
          %s2478 = smul.addr %s2477, 256
          %s2479 = scalar_lea.vmem [#allocation10], %s2478
          %2480 = dma.done %s2476, 4096
        $region88: #{tpu_custom_call.1} parent=79 // pred_fallthru
          _
      $region80: #{tpu_custom_call.1} parent=5 // pred_fallthru
        _
    $region6: #{tpu_custom_call.1} parent=1 // loop_footer
      %s29 = sadd.s32 1, %s25
    $region7: #{tpu_custom_call.1} parent=1 // loop_footer_branch
      %24 = sbr.rel target = $region3
    $region8: #{tpu_custom_call.1} parent=1 // loop_exit
      _
    %2481 = vsyncpa [#allocation4], 1
    %s2482 = scalar_lea.sflag [#allocation4], 1
    %2483 = vsyncpa %s2482, 1
    %2484 = vsyncpa [#allocation7], 1
    %s2485 = scalar_lea.sflag [#allocation7], 1
    %2486 = vsyncpa %s2485, 1
    %2487 = vsyncpa [#allocation5], 1
    %s2488 = scalar_lea.sflag [#allocation5], 1
    %2489 = vsyncpa %s2488, 1
    %2490 = vsyncpa [#allocation11], 1
    %s2491 = scalar_lea.sflag [#allocation11], 1
    %2492 = vsyncpa %s2491, 1

</llo_original>
